<compile_context>
chip_gen: v7x
topology: tpu7x:2x2x1
jax: 0.10.0
libtpu: 0.0.40
codegen_flags: <defaults>
</compile_context>

<pallas_src>
import functools

import jax
import jax.numpy as jnp
from jax.experimental import pallas as pl
from jax.experimental.pallas import tpu as pltpu

INPUT_SIZE = 28
HIDDEN = 64
OUT_FEATURES = 10
OUT_PAD = 128  # lane-dense output width -> unmasked final store


def lstm_last_linear_kernel(x_ref, wih_ref, whh_ref, b_ref, wout_ref, bout_ref,
                            o_ref, gates_scr, *, seq_len, tile_b):
    H = HIDDEN
    TB = tile_b

    # ---- Phase 1: input projection for ALL timesteps in one bf16 MXU call -----
    # x_ref is (T, TB, I) time-major bf16; TB is a multiple of 16, so merging the
    # leading dim into the sublane dim is a layout-free reshape for bf16 tiling.
    x_all = x_ref[...].reshape(seq_len * TB, INPUT_SIZE)
    gates_scr[...] = (
        jnp.dot(x_all, wih_ref[...], preferred_element_type=jnp.float32)
        + b_ref[...])                                     # (T*TB, 4H) f32

    whh = whh_ref[...]                                    # (H, 4H) bf16, resident

    # ---- Phase 2: recurrence ---------------------------------------------------
    # Gate math in f32; only the MXU operand (h) is cast to bf16 each step.
    # g-gate columns were pre-scaled by 2 in the wrapper, so one full-width
    # sigmoid gives all gates: tanh(g) = 2*sigmoid(2g) - 1.
    def step(t, carry):
        h, c = carry
        row = pl.multiple_of(t * TB, TB)
        gx = gates_scr[pl.ds(row, TB), :]                 # (TB, 4H) precomputed x part
        gates = gx + jnp.dot(h.astype(jnp.bfloat16), whh,
                             preferred_element_type=jnp.float32)
        sig = jax.nn.sigmoid(gates)                       # single (TB,4H) EUP pass
        i_g = sig[:, 0 * H:1 * H]
        f_g = sig[:, 1 * H:2 * H]
        g_g = 2.0 * sig[:, 2 * H:3 * H] - 1.0             # == tanh(original g preact)
        o_g = sig[:, 3 * H:4 * H]
        c_new = f_g * c + i_g * g_g
        h_new = o_g * jnp.tanh(c_new)                     # only H lanes of tanh
        return (h_new, c_new)

    h0 = jnp.zeros((TB, H), jnp.float32)
    c0 = jnp.zeros((TB, H), jnp.float32)
    # TODO(synk): for very long sequences, hold w_hh stationary in the MXU via
    # pltpu.matmul_push_rhs / matmul_acc_lhs / matmul_pop instead of jnp.dot.
    unroll = True if seq_len <= 16 else 8
    h_T, _ = jax.lax.fori_loop(0, seq_len, step, (h0, c0), unroll=unroll)

    # ---- Phase 3: fused final Linear (lane-padded to 128 -> unmasked store) ---
    o_ref[...] = (jnp.dot(h_T.astype(jnp.bfloat16), wout_ref[...],
                          preferred_element_type=jnp.float32)
                  + bout_ref[...])


def rnn_model_forward(x, params):
    """x: (B, T, INPUT_SIZE) float32. Returns (B, OUT_FEATURES) float32."""
    B, T, I = x.shape
    assert I == INPUT_SIZE
    H = HIDDEN

    # Batch tile: multiple of 16 (bf16 sublane packing); 128 rows at larger batch
    # so the per-step matmul has a useful M and the batch grid axis can feed both
    # TensorCores (v7x) / pipeline DMA with compute.
    if B >= 128:
        TB = 128
    else:
        TB = max(16, ((B + 15) // 16) * 16)
    Bp = ((B + TB - 1) // TB) * TB
    num_blocks = Bp // TB

    # Time-major, batch-padded, bf16 (halves HBM bytes for the x slab).
    # TODO(synk): accept time-major (T,B,I) input from the caller to drop this
    # extra (small) HBM pass entirely.
    x_tb = jnp.swapaxes(x.astype(jnp.bfloat16), 0, 1)      # (T, B, I)
    if Bp != B:
        x_tb = jnp.pad(x_tb, ((0, 0), (0, Bp - B), (0, 0)))

    # Fused weights; pre-scale the g-gate block by 2 (exact power-of-2 scale) so
    # the kernel can use tanh(x) = 2*sigmoid(2x) - 1 with one full-width sigmoid.
    g_sl = slice(2 * H, 3 * H)
    wih_t = params["w_ih"].T                                # (I, 4H)
    whh_t = params["w_hh"].T                                # (H, 4H)
    b = (params["b_ih"] + params["b_hh"]).reshape(1, 4 * H)
    wih_t = wih_t.at[:, g_sl].multiply(2.0)
    whh_t = whh_t.at[:, g_sl].multiply(2.0)
    b = b.at[:, g_sl].multiply(2.0)
    wih_bf = wih_t.astype(jnp.bfloat16)
    whh_bf = whh_t.astype(jnp.bfloat16)

    # Zero-pad the output projection to 128 lanes -> unmasked final store.
    wout_bf = (jnp.zeros((H, OUT_PAD), jnp.float32)
               .at[:, :OUT_FEATURES].set(params["w_out"].T)
               .astype(jnp.bfloat16))
    bout = jnp.zeros((1, OUT_PAD), jnp.float32).at[:, :OUT_FEATURES].set(
        params["b_out"])

    kernel = functools.partial(lstm_last_linear_kernel, seq_len=T, tile_b=TB)

    out_padded = pl.pallas_call(
        kernel,
        out_shape=jax.ShapeDtypeStruct((Bp, OUT_PAD), jnp.float32),
        grid=(num_blocks,),
        in_specs=[
            pl.BlockSpec((T, TB, I), lambda nb: (0, nb, 0)),    # x, batch-tiled
            pl.BlockSpec((I, 4 * H), lambda nb: (0, 0)),        # w_ih^T (bf16)
            pl.BlockSpec((H, 4 * H), lambda nb: (0, 0)),        # w_hh^T (bf16)
            pl.BlockSpec((1, 4 * H), lambda nb: (0, 0)),        # fused bias (f32)
            pl.BlockSpec((H, OUT_PAD), lambda nb: (0, 0)),      # w_out^T padded
            pl.BlockSpec((1, OUT_PAD), lambda nb: (0, 0)),      # b_out padded
        ],
        out_specs=pl.BlockSpec((TB, OUT_PAD), lambda nb: (nb, 0)),
        scratch_shapes=[pltpu.VMEM((T * TB, 4 * H), jnp.float32)],
        compiler_params=pltpu.CompilerParams(
            dimension_semantics=("parallel",)),
    )(x_tb, wih_bf, whh_bf, b, wout_bf, bout)

    return out_padded[:B, :OUT_FEATURES]


def rnn_model_reference(x, params):
    """Pure-JAX f32 reference of the same forward pass (for sanity check)."""
    B, T, I = x.shape
    H = HIDDEN
    w_ih, w_hh = params["w_ih"], params["w_hh"]
    b_ih, b_hh = params["b_ih"], params["b_hh"]

    def step(carry, x_t):
        h, c = carry
        gates = x_t @ w_ih.T + b_ih + h @ w_hh.T + b_hh
        i = jax.nn.sigmoid(gates[:, 0 * H:1 * H])
        f = jax.nn.sigmoid(gates[:, 1 * H:2 * H])
        g = jnp.tanh(gates[:, 2 * H:3 * H])
        o = jax.nn.sigmoid(gates[:, 3 * H:4 * H])
        c = f * c + i * g
        h = o * jnp.tanh(c)
        return (h, c), None

    h0 = jnp.zeros((B, H), jnp.float32)
    c0 = jnp.zeros((B, H), jnp.float32)
    (h_T, _), _ = jax.lax.scan(step, (h0, c0), jnp.swapaxes(x, 0, 1))
    return h_T @ params["w_out"].T + params["b_out"]


def make_params(key):
    ks = jax.random.split(key, 6)
    H, I = HIDDEN, INPUT_SIZE
    s = 1.0 / jnp.sqrt(H)
    return {
        "w_ih": jax.random.uniform(ks[0], (4 * H, I), jnp.float32, -s, s),
        "w_hh": jax.random.uniform(ks[1], (4 * H, H), jnp.float32, -s, s),
        "b_ih": jax.random.uniform(ks[2], (4 * H,), jnp.float32, -s, s),
        "b_hh": jax.random.uniform(ks[3], (4 * H,), jnp.float32, -s, s),
        "w_out": jax.random.uniform(ks[4], (OUT_FEATURES, H), jnp.float32, -s, s),
        "b_out": jax.random.uniform(ks[5], (OUT_FEATURES,), jnp.float32, -s, s),
    }


if __name__ == "__main__":
    key = jax.random.PRNGKey(0)
    k_x, k_p = jax.random.split(key)

    B, T = 2, 8
    x = jax.random.normal(k_x, (B, T, INPUT_SIZE), jnp.float32)
    params = make_params(k_p)

    out = rnn_model_forward(x, params)
    out = jax.block_until_ready(out)

    ref = rnn_model_reference(x, params)
    assert out.shape == (B, OUT_FEATURES)
    # bf16 MXU operands -> loosened tolerance vs. the f32 reference.
    assert jnp.allclose(out, ref, atol=2e-2, rtol=2e-2), "mismatch vs JAX reference"

    print("KERNEL_OK")
</pallas_src>

<mosaic_0001>
module attributes {stable_mosaic.version = 11 : i64} {
  func.func @lstm_last_linear_kernel(%arg0: i32, %arg1: memref<8x16x28xbf16, #tpu.memory_space<vmem>>, %arg2: memref<28x256xbf16, #tpu.memory_space<vmem>>, %arg3: memref<64x256xbf16, #tpu.memory_space<vmem>>, %arg4: memref<1x256xf32, #tpu.memory_space<vmem>>, %arg5: memref<64x128xbf16, #tpu.memory_space<vmem>>, %arg6: memref<1x128xf32, #tpu.memory_space<vmem>>, %arg7: memref<16x128xf32, #tpu.memory_space<vmem>>, %arg8: memref<128x256xf32, #tpu.memory_space<vmem>>) attributes {dimension_semantics = [#tpu.dimension_semantics<parallel>], iteration_bounds = array<i64: 1>, scalar_prefetch = 0 : i64, scratch_operands = 1 : i64, tpu.core_type = #tpu.core_type<tc>, window_params = [{transform_indices = @transform_0, window_bounds = array<i64: 8, 16, 28>}, {pipeline_mode = #tpu.pipeline_mode<synchronous>, transform_indices = @transform_1, window_bounds = array<i64: 28, 256>}, {pipeline_mode = #tpu.pipeline_mode<synchronous>, transform_indices = @transform_2, window_bounds = array<i64: 64, 256>}, {pipeline_mode = #tpu.pipeline_mode<synchronous>, transform_indices = @transform_3, window_bounds = array<i64: 1, 256>}, {pipeline_mode = #tpu.pipeline_mode<synchronous>, transform_indices = @transform_4, window_bounds = array<i64: 64, 128>}, {pipeline_mode = #tpu.pipeline_mode<synchronous>, transform_indices = @transform_5, window_bounds = array<i64: 1, 128>}, {transform_indices = @transform_6, window_bounds = array<i64: 16, 128>}]} {
    %c0 = arith.constant 0 : index
    %c0_0 = arith.constant 0 : index
    %c0_1 = arith.constant 0 : index
    %0 = vector.load %arg1[%c0, %c0_0, %c0_1] : memref<8x16x28xbf16, #tpu.memory_space<vmem>>, vector<8x16x28xbf16>
    %1 = vector.shape_cast %0 : vector<8x16x28xbf16> to vector<128x28xbf16>
    %c0_2 = arith.constant 0 : index
    %c0_3 = arith.constant 0 : index
    %2 = vector.load %arg2[%c0_2, %c0_3] : memref<28x256xbf16, #tpu.memory_space<vmem>>, vector<28x256xbf16>
    %cst = arith.constant dense<0.000000e+00> : vector<128x256xf32>
    %3 = tpu.matmul %1, %2, %cst {dimension_numbers = #tpu.dot_dimension_numbers<[1], [0], [0], [1], [0, 0, 1, 1], [], []>} : vector<128x28xbf16>, vector<28x256xbf16>, vector<128x256xf32> -> vector<128x256xf32>
    %c0_4 = arith.constant 0 : index
    %c0_5 = arith.constant 0 : index
    %4 = vector.load %arg4[%c0_4, %c0_5] : memref<1x256xf32, #tpu.memory_space<vmem>>, vector<1x256xf32>
    %5 = vector.broadcast %4 : vector<1x256xf32> to vector<128x256xf32>
    %6 = arith.addf %3, %5 : vector<128x256xf32>
    %c0_6 = arith.constant 0 : index
    %c0_7 = arith.constant 0 : index
    %7 = vector.load %arg8[%c0_6, %c0_7] : memref<128x256xf32, #tpu.memory_space<vmem>>, vector<128x256xf32>
    tpu.vector_store %arg8[%c0_6, %c0_7], %6 {strides = array<i32>} : memref<128x256xf32, #tpu.memory_space<vmem>>, vector<128x256xf32>,
    %c0_8 = arith.constant 0 : index
    %c0_9 = arith.constant 0 : index
    %8 = vector.load %arg3[%c0_8, %c0_9] : memref<64x256xbf16, #tpu.memory_space<vmem>>, vector<64x256xbf16>
    %cst_10 = arith.constant 0.000000e+00 : f32
    %9 = vector.broadcast %cst_10 : f32 to vector<16x64xf32>
    %cst_11 = arith.constant 0.000000e+00 : f32
    %10 = vector.broadcast %cst_11 : f32 to vector<16x64xf32>
    %c0_i32 = arith.constant 0 : i32
    %c16_i32 = arith.constant 16 : i32
    %11 = arith.muli %c0_i32, %c16_i32 : i32
    %12 = tpu.assume_multiple %11, 16 : i32
    %13 = arith.index_cast %12 : i32 to index
    %c0_12 = arith.constant 0 : index
    %14 = vector.load %arg8[%13, %c0_12] : memref<128x256xf32, #tpu.memory_space<vmem>>, vector<16x256xf32>
    %15 = arith.truncf %9 : vector<16x64xf32> to vector<16x64xbf16>
    %cst_13 = arith.constant dense<0.000000e+00> : vector<16x256xf32>
    %16 = tpu.matmul %15, %8, %cst_13 {dimension_numbers = #tpu.dot_dimension_numbers<[1], [0], [0], [1], [0, 0, 1, 1], [], []>} : vector<16x64xbf16>, vector<64x256xbf16>, vector<16x256xf32> -> vector<16x256xf32>
    %17 = arith.addf %14, %16 : vector<16x256xf32>
    %18 = arith.negf %17 : vector<16x256xf32>
    %19 = math.exp %18 : vector<16x256xf32>
    %cst_14 = arith.constant 1.000000e+00 : f32
    %20 = vector.broadcast %cst_14 : f32 to vector<16x256xf32>
    %21 = arith.addf %20, %19 : vector<16x256xf32>
    %22 = arith.divf %20, %21 : vector<16x256xf32>
    %23 = vector.extract_strided_slice %22 {offsets = [0, 0], sizes = [16, 64], strides = [1, 1]} : vector<16x256xf32> to vector<16x64xf32>
    %24 = vector.extract_strided_slice %22 {offsets = [0, 64], sizes = [16, 64], strides = [1, 1]} : vector<16x256xf32> to vector<16x64xf32>
    %25 = vector.extract_strided_slice %22 {offsets = [0, 128], sizes = [16, 64], strides = [1, 1]} : vector<16x256xf32> to vector<16x64xf32>
    %cst_15 = arith.constant 2.000000e+00 : f32
    %26 = vector.broadcast %cst_15 : f32 to vector<16x64xf32>
    %27 = arith.mulf %26, %25 : vector<16x64xf32>
    %cst_16 = arith.constant 1.000000e+00 : f32
    %28 = vector.broadcast %cst_16 : f32 to vector<16x64xf32>
    %29 = arith.subf %27, %28 : vector<16x64xf32>
    %30 = vector.extract_strided_slice %22 {offsets = [0, 192], sizes = [16, 64], strides = [1, 1]} : vector<16x256xf32> to vector<16x64xf32>
    %31 = arith.mulf %24, %10 : vector<16x64xf32>
    %32 = arith.mulf %23, %29 : vector<16x64xf32>
    %33 = arith.addf %31, %32 : vector<16x64xf32>
    %34 = math.tanh %33 : vector<16x64xf32>
    %35 = arith.mulf %30, %34 : vector<16x64xf32>
    %c1_i32 = arith.constant 1 : i32
    %c16_i32_17 = arith.constant 16 : i32
    %36 = arith.muli %c1_i32, %c16_i32_17 : i32
    %37 = tpu.assume_multiple %36, 16 : i32
    %38 = arith.index_cast %37 : i32 to index
    %c0_18 = arith.constant 0 : index
    %39 = vector.load %arg8[%38, %c0_18] : memref<128x256xf32, #tpu.memory_space<vmem>>, vector<16x256xf32>
    %40 = arith.truncf %35 : vector<16x64xf32> to vector<16x64xbf16>
    %cst_19 = arith.constant dense<0.000000e+00> : vector<16x256xf32>
    %41 = tpu.matmul %40, %8, %cst_19 {dimension_numbers = #tpu.dot_dimension_numbers<[1], [0], [0], [1], [0, 0, 1, 1], [], []>} : vector<16x64xbf16>, vector<64x256xbf16>, vector<16x256xf32> -> vector<16x256xf32>
    %42 = arith.addf %39, %41 : vector<16x256xf32>
    %43 = arith.negf %42 : vector<16x256xf32>
    %44 = math.exp %43 : vector<16x256xf32>
    %cst_20 = arith.constant 1.000000e+00 : f32
    %45 = vector.broadcast %cst_20 : f32 to vector<16x256xf32>
    %46 = arith.addf %45, %44 : vector<16x256xf32>
    %47 = arith.divf %45, %46 : vector<16x256xf32>
    %48 = vector.extract_strided_slice %47 {offsets = [0, 0], sizes = [16, 64], strides = [1, 1]} : vector<16x256xf32> to vector<16x64xf32>
    %49 = vector.extract_strided_slice %47 {offsets = [0, 64], sizes = [16, 64], strides = [1, 1]} : vector<16x256xf32> to vector<16x64xf32>
    %50 = vector.extract_strided_slice %47 {offsets = [0, 128], sizes = [16, 64], strides = [1, 1]} : vector<16x256xf32> to vector<16x64xf32>
    %cst_21 = arith.constant 2.000000e+00 : f32
    %51 = vector.broadcast %cst_21 : f32 to vector<16x64xf32>
    %52 = arith.mulf %51, %50 : vector<16x64xf32>
    %cst_22 = arith.constant 1.000000e+00 : f32
    %53 = vector.broadcast %cst_22 : f32 to vector<16x64xf32>
    %54 = arith.subf %52, %53 : vector<16x64xf32>
    %55 = vector.extract_strided_slice %47 {offsets = [0, 192], sizes = [16, 64], strides = [1, 1]} : vector<16x256xf32> to vector<16x64xf32>
    %56 = arith.mulf %49, %33 : vector<16x64xf32>
    %57 = arith.mulf %48, %54 : vector<16x64xf32>
    %58 = arith.addf %56, %57 : vector<16x64xf32>
    %59 = math.tanh %58 : vector<16x64xf32>
    %60 = arith.mulf %55, %59 : vector<16x64xf32>
    %c2_i32 = arith.constant 2 : i32
    %c16_i32_23 = arith.constant 16 : i32
    %61 = arith.muli %c2_i32, %c16_i32_23 : i32
    %62 = tpu.assume_multiple %61, 16 : i32
    %63 = arith.index_cast %62 : i32 to index
    %c0_24 = arith.constant 0 : index
    %64 = vector.load %arg8[%63, %c0_24] : memref<128x256xf32, #tpu.memory_space<vmem>>, vector<16x256xf32>
    %65 = arith.truncf %60 : vector<16x64xf32> to vector<16x64xbf16>
    %cst_25 = arith.constant dense<0.000000e+00> : vector<16x256xf32>
    %66 = tpu.matmul %65, %8, %cst_25 {dimension_numbers = #tpu.dot_dimension_numbers<[1], [0], [0], [1], [0, 0, 1, 1], [], []>} : vector<16x64xbf16>, vector<64x256xbf16>, vector<16x256xf32> -> vector<16x256xf32>
    %67 = arith.addf %64, %66 : vector<16x256xf32>
    %68 = arith.negf %67 : vector<16x256xf32>
    %69 = math.exp %68 : vector<16x256xf32>
    %cst_26 = arith.constant 1.000000e+00 : f32
    %70 = vector.broadcast %cst_26 : f32 to vector<16x256xf32>
    %71 = arith.addf %70, %69 : vector<16x256xf32>
    %72 = arith.divf %70, %71 : vector<16x256xf32>
    %73 = vector.extract_strided_slice %72 {offsets = [0, 0], sizes = [16, 64], strides = [1, 1]} : vector<16x256xf32> to vector<16x64xf32>
    %74 = vector.extract_strided_slice %72 {offsets = [0, 64], sizes = [16, 64], strides = [1, 1]} : vector<16x256xf32> to vector<16x64xf32>
    %75 = vector.extract_strided_slice %72 {offsets = [0, 128], sizes = [16, 64], strides = [1, 1]} : vector<16x256xf32> to vector<16x64xf32>
    %cst_27 = arith.constant 2.000000e+00 : f32
    %76 = vector.broadcast %cst_27 : f32 to vector<16x64xf32>
    %77 = arith.mulf %76, %75 : vector<16x64xf32>
    %cst_28 = arith.constant 1.000000e+00 : f32
    %78 = vector.broadcast %cst_28 : f32 to vector<16x64xf32>
    %79 = arith.subf %77, %78 : vector<16x64xf32>
    %80 = vector.extract_strided_slice %72 {offsets = [0, 192], sizes = [16, 64], strides = [1, 1]} : vector<16x256xf32> to vector<16x64xf32>
    %81 = arith.mulf %74, %58 : vector<16x64xf32>
    %82 = arith.mulf %73, %79 : vector<16x64xf32>
    %83 = arith.addf %81, %82 : vector<16x64xf32>
    %84 = math.tanh %83 : vector<16x64xf32>
    %85 = arith.mulf %80, %84 : vector<16x64xf32>
    %c3_i32 = arith.constant 3 : i32
    %c16_i32_29 = arith.constant 16 : i32
    %86 = arith.muli %c3_i32, %c16_i32_29 : i32
    %87 = tpu.assume_multiple %86, 16 : i32
    %88 = arith.index_cast %87 : i32 to index
    %c0_30 = arith.constant 0 : index
    %89 = vector.load %arg8[%88, %c0_30] : memref<128x256xf32, #tpu.memory_space<vmem>>, vector<16x256xf32>
    %90 = arith.truncf %85 : vector<16x64xf32> to vector<16x64xbf16>
    %cst_31 = arith.constant dense<0.000000e+00> : vector<16x256xf32>
    %91 = tpu.matmul %90, %8, %cst_31 {dimension_numbers = #tpu.dot_dimension_numbers<[1], [0], [0], [1], [0, 0, 1, 1], [], []>} : vector<16x64xbf16>, vector<64x256xbf16>, vector<16x256xf32> -> vector<16x256xf32>
    %92 = arith.addf %89, %91 : vector<16x256xf32>
    %93 = arith.negf %92 : vector<16x256xf32>
    %94 = math.exp %93 : vector<16x256xf32>
    %cst_32 = arith.constant 1.000000e+00 : f32
    %95 = vector.broadcast %cst_32 : f32 to vector<16x256xf32>
    %96 = arith.addf %95, %94 : vector<16x256xf32>
    %97 = arith.divf %95, %96 : vector<16x256xf32>
    %98 = vector.extract_strided_slice %97 {offsets = [0, 0], sizes = [16, 64], strides = [1, 1]} : vector<16x256xf32> to vector<16x64xf32>
    %99 = vector.extract_strided_slice %97 {offsets = [0, 64], sizes = [16, 64], strides = [1, 1]} : vector<16x256xf32> to vector<16x64xf32>
    %100 = vector.extract_strided_slice %97 {offsets = [0, 128], sizes = [16, 64], strides = [1, 1]} : vector<16x256xf32> to vector<16x64xf32>
    %cst_33 = arith.constant 2.000000e+00 : f32
    %101 = vector.broadcast %cst_33 : f32 to vector<16x64xf32>
    %102 = arith.mulf %101, %100 : vector<16x64xf32>
    %cst_34 = arith.constant 1.000000e+00 : f32
    %103 = vector.broadcast %cst_34 : f32 to vector<16x64xf32>
    %104 = arith.subf %102, %103 : vector<16x64xf32>
    %105 = vector.extract_strided_slice %97 {offsets = [0, 192], sizes = [16, 64], strides = [1, 1]} : vector<16x256xf32> to vector<16x64xf32>
    %106 = arith.mulf %99, %83 : vector<16x64xf32>
    %107 = arith.mulf %98, %104 : vector<16x64xf32>
    %108 = arith.addf %106, %107 : vector<16x64xf32>
    %109 = math.tanh %108 : vector<16x64xf32>
    %110 = arith.mulf %105, %109 : vector<16x64xf32>
    %c4_i32 = arith.constant 4 : i32
    %c16_i32_35 = arith.constant 16 : i32
    %111 = arith.muli %c4_i32, %c16_i32_35 : i32
    %112 = tpu.assume_multiple %111, 16 : i32
    %113 = arith.index_cast %112 : i32 to index
    %c0_36 = arith.constant 0 : index
    %114 = vector.load %arg8[%113, %c0_36] : memref<128x256xf32, #tpu.memory_space<vmem>>, vector<16x256xf32>
    %115 = arith.truncf %110 : vector<16x64xf32> to vector<16x64xbf16>
    %cst_37 = arith.constant dense<0.000000e+00> : vector<16x256xf32>
    %116 = tpu.matmul %115, %8, %cst_37 {dimension_numbers = #tpu.dot_dimension_numbers<[1], [0], [0], [1], [0, 0, 1, 1], [], []>} : vector<16x64xbf16>, vector<64x256xbf16>, vector<16x256xf32> -> vector<16x256xf32>
    %117 = arith.addf %114, %116 : vector<16x256xf32>
    %118 = arith.negf %117 : vector<16x256xf32>
    %119 = math.exp %118 : vector<16x256xf32>
    %cst_38 = arith.constant 1.000000e+00 : f32
    %120 = vector.broadcast %cst_38 : f32 to vector<16x256xf32>
    %121 = arith.addf %120, %119 : vector<16x256xf32>
    %122 = arith.divf %120, %121 : vector<16x256xf32>
    %123 = vector.extract_strided_slice %122 {offsets = [0, 0], sizes = [16, 64], strides = [1, 1]} : vector<16x256xf32> to vector<16x64xf32>
    %124 = vector.extract_strided_slice %122 {offsets = [0, 64], sizes = [16, 64], strides = [1, 1]} : vector<16x256xf32> to vector<16x64xf32>
    %125 = vector.extract_strided_slice %122 {offsets = [0, 128], sizes = [16, 64], strides = [1, 1]} : vector<16x256xf32> to vector<16x64xf32>
    %cst_39 = arith.constant 2.000000e+00 : f32
    %126 = vector.broadcast %cst_39 : f32 to vector<16x64xf32>
    %127 = arith.mulf %126, %125 : vector<16x64xf32>
    %cst_40 = arith.constant 1.000000e+00 : f32
    %128 = vector.broadcast %cst_40 : f32 to vector<16x64xf32>
    %129 = arith.subf %127, %128 : vector<16x64xf32>
    %130 = vector.extract_strided_slice %122 {offsets = [0, 192], sizes = [16, 64], strides = [1, 1]} : vector<16x256xf32> to vector<16x64xf32>
    %131 = arith.mulf %124, %108 : vector<16x64xf32>
    %132 = arith.mulf %123, %129 : vector<16x64xf32>
    %133 = arith.addf %131, %132 : vector<16x64xf32>
    %134 = math.tanh %133 : vector<16x64xf32>
    %135 = arith.mulf %130, %134 : vector<16x64xf32>
    %c5_i32 = arith.constant 5 : i32
    %c16_i32_41 = arith.constant 16 : i32
    %136 = arith.muli %c5_i32, %c16_i32_41 : i32
    %137 = tpu.assume_multiple %136, 16 : i32
    %138 = arith.index_cast %137 : i32 to index
    %c0_42 = arith.constant 0 : index
    %139 = vector.load %arg8[%138, %c0_42] : memref<128x256xf32, #tpu.memory_space<vmem>>, vector<16x256xf32>
    %140 = arith.truncf %135 : vector<16x64xf32> to vector<16x64xbf16>
    %cst_43 = arith.constant dense<0.000000e+00> : vector<16x256xf32>
    %141 = tpu.matmul %140, %8, %cst_43 {dimension_numbers = #tpu.dot_dimension_numbers<[1], [0], [0], [1], [0, 0, 1, 1], [], []>} : vector<16x64xbf16>, vector<64x256xbf16>, vector<16x256xf32> -> vector<16x256xf32>
    %142 = arith.addf %139, %141 : vector<16x256xf32>
    %143 = arith.negf %142 : vector<16x256xf32>
    %144 = math.exp %143 : vector<16x256xf32>
    %cst_44 = arith.constant 1.000000e+00 : f32
    %145 = vector.broadcast %cst_44 : f32 to vector<16x256xf32>
    %146 = arith.addf %145, %144 : vector<16x256xf32>
    %147 = arith.divf %145, %146 : vector<16x256xf32>
    %148 = vector.extract_strided_slice %147 {offsets = [0, 0], sizes = [16, 64], strides = [1, 1]} : vector<16x256xf32> to vector<16x64xf32>
    %149 = vector.extract_strided_slice %147 {offsets = [0, 64], sizes = [16, 64], strides = [1, 1]} : vector<16x256xf32> to vector<16x64xf32>
    %150 = vector.extract_strided_slice %147 {offsets = [0, 128], sizes = [16, 64], strides = [1, 1]} : vector<16x256xf32> to vector<16x64xf32>
    %cst_45 = arith.constant 2.000000e+00 : f32
    %151 = vector.broadcast %cst_45 : f32 to vector<16x64xf32>
    %152 = arith.mulf %151, %150 : vector<16x64xf32>
    %cst_46 = arith.constant 1.000000e+00 : f32
    %153 = vector.broadcast %cst_46 : f32 to vector<16x64xf32>
    %154 = arith.subf %152, %153 : vector<16x64xf32>
    %155 = vector.extract_strided_slice %147 {offsets = [0, 192], sizes = [16, 64], strides = [1, 1]} : vector<16x256xf32> to vector<16x64xf32>
    %156 = arith.mulf %149, %133 : vector<16x64xf32>
    %157 = arith.mulf %148, %154 : vector<16x64xf32>
    %158 = arith.addf %156, %157 : vector<16x64xf32>
    %159 = math.tanh %158 : vector<16x64xf32>
    %160 = arith.mulf %155, %159 : vector<16x64xf32>
    %c6_i32 = arith.constant 6 : i32
    %c16_i32_47 = arith.constant 16 : i32
    %161 = arith.muli %c6_i32, %c16_i32_47 : i32
    %162 = tpu.assume_multiple %161, 16 : i32
    %163 = arith.index_cast %162 : i32 to index
    %c0_48 = arith.constant 0 : index
    %164 = vector.load %arg8[%163, %c0_48] : memref<128x256xf32, #tpu.memory_space<vmem>>, vector<16x256xf32>
    %165 = arith.truncf %160 : vector<16x64xf32> to vector<16x64xbf16>
    %cst_49 = arith.constant dense<0.000000e+00> : vector<16x256xf32>
    %166 = tpu.matmul %165, %8, %cst_49 {dimension_numbers = #tpu.dot_dimension_numbers<[1], [0], [0], [1], [0, 0, 1, 1], [], []>} : vector<16x64xbf16>, vector<64x256xbf16>, vector<16x256xf32> -> vector<16x256xf32>
    %167 = arith.addf %164, %166 : vector<16x256xf32>
    %168 = arith.negf %167 : vector<16x256xf32>
    %169 = math.exp %168 : vector<16x256xf32>
    %cst_50 = arith.constant 1.000000e+00 : f32
    %170 = vector.broadcast %cst_50 : f32 to vector<16x256xf32>
    %171 = arith.addf %170, %169 : vector<16x256xf32>
    %172 = arith.divf %170, %171 : vector<16x256xf32>
    %173 = vector.extract_strided_slice %172 {offsets = [0, 0], sizes = [16, 64], strides = [1, 1]} : vector<16x256xf32> to vector<16x64xf32>
    %174 = vector.extract_strided_slice %172 {offsets = [0, 64], sizes = [16, 64], strides = [1, 1]} : vector<16x256xf32> to vector<16x64xf32>
    %175 = vector.extract_strided_slice %172 {offsets = [0, 128], sizes = [16, 64], strides = [1, 1]} : vector<16x256xf32> to vector<16x64xf32>
    %cst_51 = arith.constant 2.000000e+00 : f32
    %176 = vector.broadcast %cst_51 : f32 to vector<16x64xf32>
    %177 = arith.mulf %176, %175 : vector<16x64xf32>
    %cst_52 = arith.constant 1.000000e+00 : f32
    %178 = vector.broadcast %cst_52 : f32 to vector<16x64xf32>
    %179 = arith.subf %177, %178 : vector<16x64xf32>
    %180 = vector.extract_strided_slice %172 {offsets = [0, 192], sizes = [16, 64], strides = [1, 1]} : vector<16x256xf32> to vector<16x64xf32>
    %181 = arith.mulf %174, %158 : vector<16x64xf32>
    %182 = arith.mulf %173, %179 : vector<16x64xf32>
    %183 = arith.addf %181, %182 : vector<16x64xf32>
    %184 = math.tanh %183 : vector<16x64xf32>
    %185 = arith.mulf %180, %184 : vector<16x64xf32>
    %c7_i32 = arith.constant 7 : i32
    %c16_i32_53 = arith.constant 16 : i32
    %186 = arith.muli %c7_i32, %c16_i32_53 : i32
    %187 = tpu.assume_multiple %186, 16 : i32
    %188 = arith.index_cast %187 : i32 to index
    %c0_54 = arith.constant 0 : index
    %189 = vector.load %arg8[%188, %c0_54] : memref<128x256xf32, #tpu.memory_space<vmem>>, vector<16x256xf32>
    %190 = arith.truncf %185 : vector<16x64xf32> to vector<16x64xbf16>
    %cst_55 = arith.constant dense<0.000000e+00> : vector<16x256xf32>
    %191 = tpu.matmul %190, %8, %cst_55 {dimension_numbers = #tpu.dot_dimension_numbers<[1], [0], [0], [1], [0, 0, 1, 1], [], []>} : vector<16x64xbf16>, vector<64x256xbf16>, vector<16x256xf32> -> vector<16x256xf32>
    %192 = arith.addf %189, %191 : vector<16x256xf32>
    %193 = arith.negf %192 : vector<16x256xf32>
    %194 = math.exp %193 : vector<16x256xf32>
    %cst_56 = arith.constant 1.000000e+00 : f32
    %195 = vector.broadcast %cst_56 : f32 to vector<16x256xf32>
    %196 = arith.addf %195, %194 : vector<16x256xf32>
    %197 = arith.divf %195, %196 : vector<16x256xf32>
    %198 = vector.extract_strided_slice %197 {offsets = [0, 0], sizes = [16, 64], strides = [1, 1]} : vector<16x256xf32> to vector<16x64xf32>
    %199 = vector.extract_strided_slice %197 {offsets = [0, 64], sizes = [16, 64], strides = [1, 1]} : vector<16x256xf32> to vector<16x64xf32>
    %200 = vector.extract_strided_slice %197 {offsets = [0, 128], sizes = [16, 64], strides = [1, 1]} : vector<16x256xf32> to vector<16x64xf32>
    %cst_57 = arith.constant 2.000000e+00 : f32
    %201 = vector.broadcast %cst_57 : f32 to vector<16x64xf32>
    %202 = arith.mulf %201, %200 : vector<16x64xf32>
    %cst_58 = arith.constant 1.000000e+00 : f32
    %203 = vector.broadcast %cst_58 : f32 to vector<16x64xf32>
    %204 = arith.subf %202, %203 : vector<16x64xf32>
    %205 = vector.extract_strided_slice %197 {offsets = [0, 192], sizes = [16, 64], strides = [1, 1]} : vector<16x256xf32> to vector<16x64xf32>
    %206 = arith.mulf %199, %183 : vector<16x64xf32>
    %207 = arith.mulf %198, %204 : vector<16x64xf32>
    %208 = arith.addf %206, %207 : vector<16x64xf32>
    %209 = math.tanh %208 : vector<16x64xf32>
    %210 = arith.mulf %205, %209 : vector<16x64xf32>
    %c8_i32 = arith.constant 8 : i32
    %211 = arith.truncf %210 : vector<16x64xf32> to vector<16x64xbf16>
    %c0_59 = arith.constant 0 : index
    %c0_60 = arith.constant 0 : index
    %212 = vector.load %arg5[%c0_59, %c0_60] : memref<64x128xbf16, #tpu.memory_space<vmem>>, vector<64x128xbf16>
    %cst_61 = arith.constant dense<0.000000e+00> : vector<16x128xf32>
    %213 = tpu.matmul %211, %212, %cst_61 {dimension_numbers = #tpu.dot_dimension_numbers<[1], [0], [0], [1], [0, 0, 1, 1], [], []>} : vector<16x64xbf16>, vector<64x128xbf16>, vector<16x128xf32> -> vector<16x128xf32>
    %c0_62 = arith.constant 0 : index
    %c0_63 = arith.constant 0 : index
    %214 = vector.load %arg6[%c0_62, %c0_63] : memref<1x128xf32, #tpu.memory_space<vmem>>, vector<1x128xf32>
    %215 = vector.broadcast %214 : vector<1x128xf32> to vector<16x128xf32>
    %216 = arith.addf %213, %215 : vector<16x128xf32>
    %c0_64 = arith.constant 0 : index
    %c0_65 = arith.constant 0 : index
    %217 = vector.load %arg7[%c0_64, %c0_65] : memref<16x128xf32, #tpu.memory_space<vmem>>, vector<16x128xf32>
    tpu.vector_store %arg7[%c0_64, %c0_65], %216 {strides = array<i32>} : memref<16x128xf32, #tpu.memory_space<vmem>>, vector<16x128xf32>,
    return
  }
  func.func @transform_0(%arg0: i32) -> (i32, i32, i32) {
    %c0_i32 = arith.constant 0 : i32
    %c0_i32_0 = arith.constant 0 : i32
    %c0_i32_1 = arith.constant 0 : i32
    return %c0_i32, %arg0, %c0_i32_0 : i32, i32, i32
  }
  func.func @transform_1(%arg0: i32) -> (i32, i32) {
    %c0_i32 = arith.constant 0 : i32
    %c0_i32_0 = arith.constant 0 : i32
    %c0_i32_1 = arith.constant 0 : i32
    return %c0_i32, %c0_i32_0 : i32, i32
  }
  func.func @transform_2(%arg0: i32) -> (i32, i32) {
    %c0_i32 = arith.constant 0 : i32
    %c0_i32_0 = arith.constant 0 : i32
    %c0_i32_1 = arith.constant 0 : i32
    return %c0_i32, %c0_i32_0 : i32, i32
  }
  func.func @transform_3(%arg0: i32) -> (i32, i32) {
    %c0_i32 = arith.constant 0 : i32
    %c0_i32_0 = arith.constant 0 : i32
    %c0_i32_1 = arith.constant 0 : i32
    return %c0_i32, %c0_i32_0 : i32, i32
  }
  func.func @transform_4(%arg0: i32) -> (i32, i32) {
    %c0_i32 = arith.constant 0 : i32
    %c0_i32_0 = arith.constant 0 : i32
    %c0_i32_1 = arith.constant 0 : i32
    return %c0_i32, %c0_i32_0 : i32, i32
  }
  func.func @transform_5(%arg0: i32) -> (i32, i32) {
    %c0_i32 = arith.constant 0 : i32
    %c0_i32_0 = arith.constant 0 : i32
    %c0_i32_1 = arith.constant 0 : i32
    return %c0_i32, %c0_i32_0 : i32, i32
  }
  func.func @transform_6(%arg0: i32) -> (i32, i32) {
    %c0_i32 = arith.constant 0 : i32
    %c0_i32_0 = arith.constant 0 : i32
    return %arg0, %c0_i32 : i32, i32
  }
}

</mosaic_0001>

<llo_original>
// kernel: tpu_custom_call.1
$region0: #{tpu_custom_call.1}
  #allocation0 [shape = 'u32[]', space=smem, size = 0x4, offset = 0x4, fixed_abs, tag = 'smem constant byte address 0x4 - core index']
  #allocation1 [shape = 'u32[144,128]{1,0:T(1,128)}', space=vmem, size = 0x12000, scoped, tag = 'internal scratch']
  #allocation2 [shape = 'f32[128,256]{1,0:T(8,128)}', space=vmem, size = 0x20000, scoped, tag = 'scratch operand']
  %s0 = inlined_call_operand.hbm [shape: bf16[8,16,28], index: 0, kind: input, shape index: {}]
  %s1 = inlined_call_operand.hbm [shape: bf16[28,256], index: 1, kind: input, shape index: {}]
  %s2 = inlined_call_operand.hbm [shape: bf16[64,256], index: 2, kind: input, shape index: {}]
  %s3 = inlined_call_operand.vmem [shape: f32[1,256], index: 3, kind: input, shape index: {}]
  %s4 = inlined_call_operand.hbm [shape: bf16[64,128], index: 4, kind: input, shape index: {}]
  %s5 = inlined_call_operand.vmem [shape: f32[1,128], index: 5, kind: input, shape index: {}]
  %s6 = inlined_call_operand.hbm [shape: f32[16,128], index: 6, kind: output, shape index: {}]
  %s7 = sld [smem:[#allocation0]]
  $region50: #{tpu_custom_call.1} parent=0
    _
  %s9 = ssub.s32 1, %s7
  %s10 = scalar_select 0, %s9, %s7
  $region1: #{tpu_custom_call.1} parent=0
    #allocation3 [shape = 'u8[32768]{0}', space=vmem, size = 0x8000, scoped, tag = 'input window, operand 0, single buffered']
    #allocation4 [shape = 's32[1]{0}', space=sflag, size = 0x4, scoped, tag = 'scoped memory for tpu_custom_call.1']
    #allocation5 [shape = 's32[1]{0}', space=sflag, size = 0x4, scoped, tag = 'scoped memory for tpu_custom_call.1']
    #allocation6 [shape = 'u8[16384]{0}', space=vmem, size = 0x4000, scoped, tag = 'input window, operand 1, single buffered']
    #allocation7 [shape = 's32[1]{0}', space=sflag, size = 0x4, scoped, tag = 'scoped memory for tpu_custom_call.1']
    #allocation8 [shape = 'u8[32768]{0}', space=vmem, size = 0x8000, scoped, tag = 'input window, operand 2, single buffered']
    #allocation9 [shape = 'u8[16384]{0}', space=vmem, size = 0x4000, scoped, tag = 'input window, operand 4, single buffered']
    #allocation10 [shape = 's32[1]{0}', space=sflag, size = 0x4, scoped, tag = 'scoped memory for tpu_custom_call.1']
    #allocation11 [shape = 'u8[8192]{0}', space=vmem, size = 0x2000, scoped, tag = 'output window, operand 0, single buffered']
    %11 = vsyncpa [#allocation4], 0
    %12 = vsyncpa [#allocation7], 0
    %13 = vsyncpa [#allocation10], 0
    %14 = vsyncpa [#allocation5], 0
    // Predicated region
    $region2: #{tpu_custom_call.1} parent=1 // pred_check
      _
    $region3: #{tpu_custom_call.1} parent=1 // pred_check_branch
      %16 = sbr.rel (0) target = $region5
    $region4: #{tpu_custom_call.1} parent=1 // pred_region
      %s18 = ssub.s32 1024, 1024
      %19 = vsyncadd [#allocation4], %s18
      %s20 = sshll.u32 [#allocation3], 4
      %s21 = int_to_ptr.vmem [resolvable:$true] %s20
      %26 = dma.hbm_to_vmem [thread:$0]  %s0, 1024, %s21, [#allocation4], 64, 64, 4
    $region5: #{tpu_custom_call.1} parent=1 // pred_fallthru
      _
    // Predicated region
    $region6: #{tpu_custom_call.1} parent=1 // pred_check
      _
    $region7: #{tpu_custom_call.1} parent=1 // pred_check_branch
      %28 = sbr.rel (0) target = $region9
    $region8: #{tpu_custom_call.1} parent=1 // pred_region
      %s30 = ssub.s32 512, 512
      %31 = vsyncadd [#allocation7], %s30
      %s32 = sshll.u32 [#allocation6], 4
      %s33 = int_to_ptr.vmem [resolvable:$true] %s32
      %38 = dma.hbm_to_vmem [thread:$0]  %s1, 512, %s33, [#allocation7], 128, 128, 8
    $region9: #{tpu_custom_call.1} parent=1 // pred_fallthru
      _
    // Predicated region
    $region10: #{tpu_custom_call.1} parent=1 // pred_check
      _
    $region11: #{tpu_custom_call.1} parent=1 // pred_check_branch
      %40 = sbr.rel (0) target = $region13
    $region12: #{tpu_custom_call.1} parent=1 // pred_region
      %s42 = ssub.s32 1024, 1024
      %43 = vsyncadd [#allocation7], %s42
      %s44 = sshll.u32 [#allocation8], 4
      %s45 = int_to_ptr.vmem [resolvable:$true] %s44
      %50 = dma.hbm_to_vmem [thread:$0]  %s2, 1024, %s45, [#allocation7], 128, 128, 8
    $region13: #{tpu_custom_call.1} parent=1 // pred_fallthru
      _
    // Predicated region
    $region14: #{tpu_custom_call.1} parent=1 // pred_check
      _
    $region15: #{tpu_custom_call.1} parent=1 // pred_check_branch
      %52 = sbr.rel (0) target = $region17
    $region16: #{tpu_custom_call.1} parent=1 // pred_region
      _
    $region17: #{tpu_custom_call.1} parent=1 // pred_fallthru
      _
    // Predicated region
    $region18: #{tpu_custom_call.1} parent=1 // pred_check
      _
    $region19: #{tpu_custom_call.1} parent=1 // pred_check_branch
      %54 = sbr.rel (0) target = $region21
    $region20: #{tpu_custom_call.1} parent=1 // pred_region
      %s56 = ssub.s32 512, 512
      %57 = vsyncadd [#allocation10], %s56
      %s58 = sshll.u32 [#allocation9], 4
      %s59 = int_to_ptr.vmem [resolvable:$true] %s58
      %64 = dma.hbm_to_vmem [thread:$0]  %s4, 512, %s59, [#allocation10], 64, 64, 4
    $region21: #{tpu_custom_call.1} parent=1 // pred_fallthru
      _
    // Predicated region
    $region22: #{tpu_custom_call.1} parent=1 // pred_check
      _
    $region23: #{tpu_custom_call.1} parent=1 // pred_check_branch
      %66 = sbr.rel (0) target = $region25
    $region24: #{tpu_custom_call.1} parent=1 // pred_region
      _
    $region25: #{tpu_custom_call.1} parent=1 // pred_fallthru
      _
    // Predicated region
    $region26: #{tpu_custom_call.1} parent=1 // pred_check
      _
    $region27: #{tpu_custom_call.1} parent=1 // pred_check_branch
      %68 = sbr.rel (0) target = $region29
    $region28: #{tpu_custom_call.1} parent=1 // pred_region
      %69 = dma.done [#allocation4], 1024
    $region29: #{tpu_custom_call.1} parent=1 // pred_fallthru
      _
    // Predicated region
    $region30: #{tpu_custom_call.1} parent=1 // pred_check
      _
    $region31: #{tpu_custom_call.1} parent=1 // pred_check_branch
      %71 = sbr.rel (0) target = $region33
    $region32: #{tpu_custom_call.1} parent=1 // pred_region
      %72 = dma.done [#allocation7], 512
    $region33: #{tpu_custom_call.1} parent=1 // pred_fallthru
      _
    // Predicated region
    $region34: #{tpu_custom_call.1} parent=1 // pred_check
      _
    $region35: #{tpu_custom_call.1} parent=1 // pred_check_branch
      %74 = sbr.rel (0) target = $region37
    $region36: #{tpu_custom_call.1} parent=1 // pred_region
      %75 = dma.done [#allocation7], 1024
    $region37: #{tpu_custom_call.1} parent=1 // pred_fallthru
      _
    // Predicated region
    $region38: #{tpu_custom_call.1} parent=1 // pred_check
      _
    $region39: #{tpu_custom_call.1} parent=1 // pred_check_branch
      %77 = sbr.rel (0) target = $region41
    $region40: #{tpu_custom_call.1} parent=1 // pred_region
      %78 = dma.done [#allocation10], 512
    $region41: #{tpu_custom_call.1} parent=1 // pred_fallthru
      _
    %v80 = vld [vmem:[#allocation3] sm:$0xf]
    %v81 = vld [vmem:[#allocation3 + $0x4] sm:$0xf]
    %v82 = vld [vmem:[#allocation3 + $0x8] sm:$0xf]
    %v83 = vld [vmem:[#allocation3 + $0xc] sm:$0xf]
    %v84 = vld [vmem:[#allocation3 + $0x10] sm:$0xf]
    %v85 = vld [vmem:[#allocation3 + $0x14] sm:$0xf]
    %v86 = vld [vmem:[#allocation3 + $0x18] sm:$0xf]
    %v87 = vld [vmem:[#allocation3 + $0x1c] sm:$0xf]
    %v88 = vld [vmem:[#allocation3 + $0x20] sm:$0xf]
    %v89 = vld [vmem:[#allocation3 + $0x24] sm:$0xf]
    %v90 = vld [vmem:[#allocation3 + $0x28] sm:$0xf]
    %v91 = vld [vmem:[#allocation3 + $0x2c] sm:$0xf]
    %v92 = vld [vmem:[#allocation3 + $0x30] sm:$0xf]
    %v93 = vld [vmem:[#allocation3 + $0x34] sm:$0xf]
    %v94 = vld [vmem:[#allocation3 + $0x38] sm:$0xf]
    %v95 = vld [vmem:[#allocation3 + $0x3c] sm:$0xf]
    %v96 = vld [vmem:[#allocation6] sm:$0xff]
    %v97 = vld [vmem:[#allocation6 + $0x8] sm:$0xff]
    %v98 = vld [vmem:[#allocation6 + $0x10] sm:$0xff]
    %v99 = vld [vmem:[#allocation6 + $0x18] sm:$0x33]
    %v100 = vld [vmem:[%s3] sm:$0x3]
    %v102 = vlaneseq
    %v103 = vshrl.u32 %v102, 7
    %v104 = vsub.s32 0, %v103
    %v105 = vrot.slane %v100, %v104
    %v106 = vlaneseq
    %v107 = vshrl.u32 %v106, 7
    %v108 = vsub.s32 1, %v107
    %v109 = vrot.slane %v100, %v108
    %v128 = vunpack.c.l.b16 %v80
    %v129 = vunpack.c.l.b16 %v81
    %v130 = vunpack.c.l.b16 %v82
    %v131 = vunpack.c.l.b16 %v83
    %v132 = vunpack.c.l.b16 %v84
    %v133 = vunpack.c.l.b16 %v85
    %v134 = vunpack.c.l.b16 %v86
    %v135 = vunpack.c.l.b16 %v87
    %v136 = vunpack.c.l.b16 %v88
    %v137 = vunpack.c.l.b16 %v89
    %v138 = vunpack.c.l.b16 %v90
    %v139 = vunpack.c.l.b16 %v91
    %v140 = vunpack.c.l.b16 %v92
    %v141 = vunpack.c.l.b16 %v93
    %v142 = vunpack.c.l.b16 %v94
    %v143 = vunpack.c.l.b16 %v95
    %v144 = vpack.c.b16 %v129, %v128
    %v145 = vpack.c.b16 %v131, %v130
    %v146 = vpack.c.b16 %v133, %v132
    %v147 = vpack.c.b16 %v135, %v134
    %v148 = vpack.c.b16 %v137, %v136
    %v149 = vpack.c.b16 %v139, %v138
    %v150 = vpack.c.b16 %v141, %v140
    %v151 = vpack.c.b16 %v143, %v142
    %v156 = vunpack.c.l.b16 %v96
    %v157 = vunpack.c.h.b16 %v96
    %v158 = vunpack.c.l.b16 %v97
    %v159 = vunpack.c.h.b16 %v97
    %v160 = vunpack.c.l.b16 %v98
    %v161 = vunpack.c.h.b16 %v98
    %v162 = vunpack.c.l.b16 %v99
    %v163 = vunpack.c.h.b16 %v99
    %v164 = vpack.c.b16 %v158, %v156
    %v165 = vpack.c.b16 %v159, %v157
    %v166 = vpack.c.b16 %v162, %v160
    %v167 = vpack.c.b16 %v163, %v161
    %vm170 = vcmask 228352
    %v172 = vsel %vm170, %v144, 0
    %v175 = vsel %vm170, %v145, 0
    %v178 = vsel %vm170, %v146, 0
    %v181 = vsel %vm170, %v147, 0
    %v184 = vsel %vm170, %v148, 0
    %v187 = vsel %vm170, %v149, 0
    %v190 = vsel %vm170, %v150, 0
    %v193 = vsel %vm170, %v151, 0
    %vm195 = vcmask 1045504
    %v197 = vsel %vm195, %v166, 0
    %v200 = vsel %vm195, %v167, 0
    %202 = vmatprep.subr.bf16.mxu0 %v165
    %203 = vmatpush1.bf16.msra.mxu0 %v164
    %204 = vmatprep.subr.bf16.mxu0 %v200
    %205 = vmatpush1.bf16.msra.mxu0 %v197
    %206 = vmatprep.subr.bf16.mxu0 0
    %207 = vmatpush1.bf16.msra.mxu0 0
    %208 = vmatprep.subr.bf16.mxu0 0
    %209 = vmatpush1.bf16.msra.mxu0 0
    %210 = vmatprep.subr.bf16.mxu0 0
    %211 = vmatpush1.bf16.msra.mxu0 0
    %212 = vmatprep.subr.bf16.mxu0 0
    %213 = vmatpush1.bf16.msra.mxu0 0
    %214 = vmatprep.subr.bf16.mxu0 0
    %215 = vmatpush1.bf16.msra.mxu0 0
    %216 = vmatprep.subr.bf16.mxu0 0
    %217 = vmatpush1.bf16.msra.mxu0 0
    %218 = vmatprep.subr.bf16.mxu0 0
    %219 = vmatpush1.bf16.msra.mxu0 0
    %220 = vmatprep.subr.bf16.mxu0 0
    %221 = vmatpush1.bf16.msra.mxu0 0
    %222 = vmatprep.subr.bf16.mxu0 0
    %223 = vmatpush1.bf16.msra.mxu0 0
    %224 = vmatprep.subr.bf16.mxu0 0
    %225 = vmatpush1.bf16.msra.mxu0 0
    %226 = vmatprep.subr.bf16.mxu0 0
    %227 = vmatpush1.bf16.msra.mxu0 0
    %228 = vmatprep.subr.bf16.mxu0 0
    %229 = vmatpush1.bf16.msra.mxu0 0
    %230 = vmatprep.subr.bf16.mxu0 0
    %231 = vmatpush1.bf16.msra.mxu0 0
    %232 = vmatprep.subr.bf16.mxu0 0
    %233 = vmatpush1.bf16.msra.mxu0 0
    %234 = vmatprep.mubr.bf16.mxu0 0
    %235 = vmatmul.mubr.bf16.gmra.mrb[0].mxu0 %v172
    %v236 = vpop.f32.mrb[0].mxu0
    %v237 = vadd.f32 %v105, %v236
    %v238 = vpop.f32.mrb[0].mxu0
    %v239 = vadd.f32 %v109, %v238
    %v240 = vpop.f32.mrb[0].mxu0
    %v241 = vadd.f32 %v105, %v240
    %v242 = vpop.f32.mrb[0].mxu0
    %v243 = vadd.f32 %v109, %v242
    %244 = vmatprep.mubr.bf16.mxu0 0
    %245 = vmatmul.mubr.bf16.gmra.mrb[0].mxu0 %v175
    %v246 = vpop.f32.mrb[0].mxu0
    %v247 = vadd.f32 %v105, %v246
    %v248 = vpop.f32.mrb[0].mxu0
    %v249 = vadd.f32 %v109, %v248
    %v250 = vpop.f32.mrb[0].mxu0
    %v251 = vadd.f32 %v105, %v250
    %v252 = vpop.f32.mrb[0].mxu0
    %v253 = vadd.f32 %v109, %v252
    %254 = vmatprep.mubr.bf16.mxu0 0
    %255 = vmatmul.mubr.bf16.gmra.mrb[0].mxu0 %v178
    %v256 = vpop.f32.mrb[0].mxu0
    %v257 = vadd.f32 %v105, %v256
    %v258 = vpop.f32.mrb[0].mxu0
    %v259 = vadd.f32 %v109, %v258
    %v260 = vpop.f32.mrb[0].mxu0
    %v261 = vadd.f32 %v105, %v260
    %v262 = vpop.f32.mrb[0].mxu0
    %v263 = vadd.f32 %v109, %v262
    %264 = vmatprep.mubr.bf16.mxu0 0
    %265 = vmatmul.mubr.bf16.gmra.mrb[0].mxu0 %v181
    %v266 = vpop.f32.mrb[0].mxu0
    %v267 = vadd.f32 %v105, %v266
    %v268 = vpop.f32.mrb[0].mxu0
    %v269 = vadd.f32 %v109, %v268
    %v270 = vpop.f32.mrb[0].mxu0
    %v271 = vadd.f32 %v105, %v270
    %v272 = vpop.f32.mrb[0].mxu0
    %v273 = vadd.f32 %v109, %v272
    %274 = vmatprep.mubr.bf16.mxu0 0
    %275 = vmatmul.mubr.bf16.gmra.mrb[0].mxu0 %v184
    %v276 = vpop.f32.mrb[0].mxu0
    %v277 = vadd.f32 %v105, %v276
    %v278 = vpop.f32.mrb[0].mxu0
    %v279 = vadd.f32 %v109, %v278
    %v280 = vpop.f32.mrb[0].mxu0
    %v281 = vadd.f32 %v105, %v280
    %v282 = vpop.f32.mrb[0].mxu0
    %v283 = vadd.f32 %v109, %v282
    %284 = vmatprep.mubr.bf16.mxu0 0
    %285 = vmatmul.mubr.bf16.gmra.mrb[0].mxu0 %v187
    %v286 = vpop.f32.mrb[0].mxu0
    %v287 = vadd.f32 %v105, %v286
    %v288 = vpop.f32.mrb[0].mxu0
    %v289 = vadd.f32 %v109, %v288
    %v290 = vpop.f32.mrb[0].mxu0
    %v291 = vadd.f32 %v105, %v290
    %v292 = vpop.f32.mrb[0].mxu0
    %v293 = vadd.f32 %v109, %v292
    %294 = vmatprep.mubr.bf16.mxu0 0
    %295 = vmatmul.mubr.bf16.gmra.mrb[0].mxu0 %v190
    %v296 = vpop.f32.mrb[0].mxu0
    %v297 = vadd.f32 %v105, %v296
    %v298 = vpop.f32.mrb[0].mxu0
    %v299 = vadd.f32 %v109, %v298
    %v300 = vpop.f32.mrb[0].mxu0
    %v301 = vadd.f32 %v105, %v300
    %v302 = vpop.f32.mrb[0].mxu0
    %v303 = vadd.f32 %v109, %v302
    %304 = vmatprep.mubr.bf16.mxu0 0
    %305 = vmatmul.mubr.bf16.gmra.mrb[0].mxu0 %v193
    %v306 = vpop.f32.mrb[0].mxu0
    %v307 = vadd.f32 %v105, %v306
    %v308 = vpop.f32.mrb[0].mxu0
    %v309 = vadd.f32 %v109, %v308
    %v310 = vpop.f32.mrb[0].mxu0
    %v311 = vadd.f32 %v105, %v310
    %v312 = vpop.f32.mrb[0].mxu0
    %v313 = vadd.f32 %v109, %v312
    %314 = vdwg.mxu0
    %315 = vst [vmem:[#allocation2] sm:$0xff] %v237
    %316 = vst [vmem:[#allocation2 + $0x8] sm:$0xff] %v239
    %317 = vst [vmem:[#allocation2 + $0x10] sm:$0xff] %v241
    %318 = vst [vmem:[#allocation2 + $0x18] sm:$0xff] %v243
    %319 = vst [vmem:[#allocation2 + $0x20] sm:$0xff] %v247
    %320 = vst [vmem:[#allocation2 + $0x28] sm:$0xff] %v249
    %321 = vst [vmem:[#allocation2 + $0x30] sm:$0xff] %v251
    %322 = vst [vmem:[#allocation2 + $0x38] sm:$0xff] %v253
    %323 = vst [vmem:[#allocation2 + $0x40] sm:$0xff] %v257
    %324 = vst [vmem:[#allocation2 + $0x48] sm:$0xff] %v259
    %325 = vst [vmem:[#allocation2 + $0x50] sm:$0xff] %v261
    %326 = vst [vmem:[#allocation2 + $0x58] sm:$0xff] %v263
    %327 = vst [vmem:[#allocation2 + $0x60] sm:$0xff] %v267
    %328 = vst [vmem:[#allocation2 + $0x68] sm:$0xff] %v269
    %329 = vst [vmem:[#allocation2 + $0x70] sm:$0xff] %v271
    %330 = vst [vmem:[#allocation2 + $0x78] sm:$0xff] %v273
    %331 = vst [vmem:[#allocation2 + $0x80] sm:$0xff] %v277
    %332 = vst [vmem:[#allocation2 + $0x88] sm:$0xff] %v279
    %333 = vst [vmem:[#allocation2 + $0x90] sm:$0xff] %v281
    %334 = vst [vmem:[#allocation2 + $0x98] sm:$0xff] %v283
    %335 = vst [vmem:[#allocation2 + $0xa0] sm:$0xff] %v287
    %336 = vst [vmem:[#allocation2 + $0xa8] sm:$0xff] %v289
    %337 = vst [vmem:[#allocation2 + $0xb0] sm:$0xff] %v291
    %338 = vst [vmem:[#allocation2 + $0xb8] sm:$0xff] %v293
    %339 = vst [vmem:[#allocation2 + $0xc0] sm:$0xff] %v297
    %340 = vst [vmem:[#allocation2 + $0xc8] sm:$0xff] %v299
    %341 = vst [vmem:[#allocation2 + $0xd0] sm:$0xff] %v301
    %342 = vst [vmem:[#allocation2 + $0xd8] sm:$0xff] %v303
    %343 = vst [vmem:[#allocation2 + $0xe0] sm:$0xff] %v307
    %344 = vst [vmem:[#allocation2 + $0xe8] sm:$0xff] %v309
    %345 = vst [vmem:[#allocation2 + $0xf0] sm:$0xff] %v311
    %346 = vst [vmem:[#allocation2 + $0xf8] sm:$0xff] %v313
    %v347 = vld [vmem:[#allocation8] sm:$0xff]
    %v348 = vld [vmem:[#allocation8 + $0x8] sm:$0xff]
    %v349 = vld [vmem:[#allocation8 + $0x10] sm:$0xff]
    %v350 = vld [vmem:[#allocation8 + $0x18] sm:$0xff]
    %v351 = vld [vmem:[#allocation8 + $0x20] sm:$0xff]
    %v352 = vld [vmem:[#allocation8 + $0x28] sm:$0xff]
    %v353 = vld [vmem:[#allocation8 + $0x30] sm:$0xff]
    %v354 = vld [vmem:[#allocation8 + $0x38] sm:$0xff]
    %s355 = smul.u32 0, 2
    %s356 = smul.addr %s355, 8
    %s357 = scalar_lea.vmem [#allocation2], %s356
    %v358 = vld [vmem:[%s357] sm:$0xff]
    %v359 = vld [vmem:[%s357 + $0x8] sm:$0xff]
    %v360 = vld [vmem:[%s357 + $0x10] sm:$0xff]
    %v361 = vld [vmem:[%s357 + $0x18] sm:$0xff]
    %v370 = vunpack.c.l.b16 %v347
    %v371 = vunpack.c.h.b16 %v347
    %v372 = vunpack.c.l.b16 %v348
    %v373 = vunpack.c.h.b16 %v348
    %v374 = vunpack.c.l.b16 %v349
    %v375 = vunpack.c.h.b16 %v349
    %v376 = vunpack.c.l.b16 %v350
    %v377 = vunpack.c.h.b16 %v350
    %v378 = vunpack.c.l.b16 %v351
    %v379 = vunpack.c.h.b16 %v351
    %v380 = vunpack.c.l.b16 %v352
    %v381 = vunpack.c.h.b16 %v352
    %v382 = vunpack.c.l.b16 %v353
    %v383 = vunpack.c.h.b16 %v353
    %v384 = vunpack.c.l.b16 %v354
    %v385 = vunpack.c.h.b16 %v354
    %v386 = vpack.c.b16 %v372, %v370
    %v387 = vpack.c.b16 %v373, %v371
    %v388 = vpack.c.b16 %v376, %v374
    %v389 = vpack.c.b16 %v377, %v375
    %v390 = vpack.c.b16 %v380, %v378
    %v391 = vpack.c.b16 %v381, %v379
    %v392 = vpack.c.b16 %v384, %v382
    %v393 = vpack.c.b16 %v385, %v383
    %vm402 = vcmask 523264
    %v404 = vsel %vm402, 0, 0
    %406 = vmatprep.subr.bf16.mxu0 %v387
    %407 = vmatpush1.bf16.msra.mxu0 %v386
    %408 = vmatprep.subr.bf16.mxu0 %v389
    %409 = vmatpush1.bf16.msra.mxu0 %v388
    %410 = vmatprep.subr.bf16.mxu0 %v391
    %411 = vmatpush1.bf16.msra.mxu0 %v390
    %412 = vmatprep.subr.bf16.mxu0 %v393
    %413 = vmatpush1.bf16.msra.mxu0 %v392
    %414 = vmatprep.subr.bf16.mxu0 0
    %415 = vmatpush1.bf16.msra.mxu0 0
    %416 = vmatprep.subr.bf16.mxu0 0
    %417 = vmatpush1.bf16.msra.mxu0 0
    %418 = vmatprep.subr.bf16.mxu0 0
    %419 = vmatpush1.bf16.msra.mxu0 0
    %420 = vmatprep.subr.bf16.mxu0 0
    %421 = vmatpush1.bf16.msra.mxu0 0
    %422 = vmatprep.subr.bf16.mxu0 0
    %423 = vmatpush1.bf16.msra.mxu0 0
    %424 = vmatprep.subr.bf16.mxu0 0
    %425 = vmatpush1.bf16.msra.mxu0 0
    %426 = vmatprep.subr.bf16.mxu0 0
    %427 = vmatpush1.bf16.msra.mxu0 0
    %428 = vmatprep.subr.bf16.mxu0 0
    %429 = vmatpush1.bf16.msra.mxu0 0
    %430 = vmatprep.subr.bf16.mxu0 0
    %431 = vmatpush1.bf16.msra.mxu0 0
    %432 = vmatprep.subr.bf16.mxu0 0
    %433 = vmatpush1.bf16.msra.mxu0 0
    %434 = vmatprep.subr.bf16.mxu0 0
    %435 = vmatpush1.bf16.msra.mxu0 0
    %436 = vmatprep.subr.bf16.mxu0 0
    %437 = vmatpush1.bf16.msra.mxu0 0
    %438 = vmatprep.mubr.bf16.mxu0 0
    %439 = vmatmul.mubr.bf16.gmra.mrb[0].mxu0 %v404
    %v440 = vpop.f32.mrb[0].mxu0
    %v441 = vadd.f32 0.0, %v440
    %v442 = vpop.f32.mrb[0].mxu0
    %v443 = vadd.f32 0.0, %v442
    %v444 = vpop.f32.mrb[0].mxu0
    %v445 = vadd.f32 0.0, %v444
    %v446 = vpop.f32.mrb[0].mxu0
    %v447 = vadd.f32 0.0, %v446
    %448 = vdwg.mxu0
    %v449 = vadd.f32 %v358, %v441
    %v450 = vadd.f32 %v359, %v443
    %v451 = vadd.f32 %v360, %v445
    %v452 = vadd.f32 %v361, %v447
    %v453 = vxor.u32 %v449, 2147483648
    %v454 = vxor.u32 %v450, 2147483648
    %v455 = vxor.u32 %v451, 2147483648
    %v456 = vxor.u32 %v452, 2147483648
    %v457 = vmul.f32 %v453, 1.442695
    %v458 = vpow.pop %v457
    %v459 = vmul.f32 %v454, 1.442695
    %v460 = vpow.pop %v459
    %v461 = vmul.f32 %v455, 1.442695
    %v462 = vpow.pop %v461
    %v463 = vmul.f32 %v456, 1.442695
    %v464 = vpow.pop %v463
    %v465 = vadd.f32 %v458, 1.0
    %v466 = vadd.f32 %v460, 1.0
    %v467 = vadd.f32 %v462, 1.0
    %v468 = vadd.f32 %v464, 1.0
    %v469 = vrcp.pop %v465
    %v470 = vmul.f32 1.0, %v469
    %v471 = vrcp.pop %v466
    %v472 = vmul.f32 1.0, %v471
    %v473 = vrcp.pop %v467
    %v474 = vmul.f32 1.0, %v473
    %v475 = vrcp.pop %v468
    %v476 = vmul.f32 1.0, %v475
    %v477 = vmul.f32 %v472, 2.0
    %v478 = vmul.f32 %v476, 2.0
    %v479 = vsub.f32 %v477, 1.0
    %v480 = vsub.f32 %v478, 1.0
    %v481 = vmul.f32 %v470, 0.0
    %v482 = vmul.f32 %v474, 0.0
    %v483 = vmul.f32 %v470, %v479
    %v484 = vmul.f32 %v474, %v480
    %487 = vrot.lane.b32.xlu0 %v483, 64
    %v488 = vpop.permute.xlu0 %487
    %489 = vrot.lane.b32.xlu0 %v484, 64
    %v490 = vpop.permute.xlu0 %489
    %v493 = vadd.f32 %v481, %v488
    %v494 = vadd.f32 %v482, %v490
    %v495 = vtanh.pop %v493
    %v496 = vtanh.pop %v494
    %v497 = vmul.f32 %v472, %v495
    %v498 = vmul.f32 %v476, %v496
    %s499 = smul.u32 2, 2
    %s500 = smul.addr %s499, 8
    %s501 = scalar_lea.vmem [#allocation2], %s500
    %v502 = vld [vmem:[%s501] sm:$0xff]
    %v503 = vld [vmem:[%s501 + $0x8] sm:$0xff]
    %v504 = vld [vmem:[%s501 + $0x10] sm:$0xff]
    %v505 = vld [vmem:[%s501 + $0x18] sm:$0xff]
    %v506 = vpack.c.bf16 %v498, %v497
    %508 = vrot.lane.b32.xlu0 %v506, 64
    %v509 = vpop.permute.xlu0 %508
    %v511 = vsel %vm402, %v509, 0
    %513 = vmatprep.subr.bf16.mxu0 %v387
    %514 = vmatpush1.bf16.msra.mxu0 %v386
    %515 = vmatprep.subr.bf16.mxu0 %v389
    %516 = vmatpush1.bf16.msra.mxu0 %v388
    %517 = vmatprep.subr.bf16.mxu0 %v391
    %518 = vmatpush1.bf16.msra.mxu0 %v390
    %519 = vmatprep.subr.bf16.mxu0 %v393
    %520 = vmatpush1.bf16.msra.mxu0 %v392
    %521 = vmatprep.subr.bf16.mxu0 0
    %522 = vmatpush1.bf16.msra.mxu0 0
    %523 = vmatprep.subr.bf16.mxu0 0
    %524 = vmatpush1.bf16.msra.mxu0 0
    %525 = vmatprep.subr.bf16.mxu0 0
    %526 = vmatpush1.bf16.msra.mxu0 0
    %527 = vmatprep.subr.bf16.mxu0 0
    %528 = vmatpush1.bf16.msra.mxu0 0
    %529 = vmatprep.subr.bf16.mxu0 0
    %530 = vmatpush1.bf16.msra.mxu0 0
    %531 = vmatprep.subr.bf16.mxu0 0
    %532 = vmatpush1.bf16.msra.mxu0 0
    %533 = vmatprep.subr.bf16.mxu0 0
    %534 = vmatpush1.bf16.msra.mxu0 0
    %535 = vmatprep.subr.bf16.mxu0 0
    %536 = vmatpush1.bf16.msra.mxu0 0
    %537 = vmatprep.subr.bf16.mxu0 0
    %538 = vmatpush1.bf16.msra.mxu0 0
    %539 = vmatprep.subr.bf16.mxu0 0
    %540 = vmatpush1.bf16.msra.mxu0 0
    %541 = vmatprep.subr.bf16.mxu0 0
    %542 = vmatpush1.bf16.msra.mxu0 0
    %543 = vmatprep.subr.bf16.mxu0 0
    %544 = vmatpush1.bf16.msra.mxu0 0
    %545 = vmatprep.mubr.bf16.mxu0 0
    %546 = vmatmul.mubr.bf16.gmra.mrb[0].mxu0 %v511
    %v547 = vpop.f32.mrb[0].mxu0
    %v548 = vadd.f32 0.0, %v547
    %v549 = vpop.f32.mrb[0].mxu0
    %v550 = vadd.f32 0.0, %v549
    %v551 = vpop.f32.mrb[0].mxu0
    %v552 = vadd.f32 0.0, %v551
    %v553 = vpop.f32.mrb[0].mxu0
    %v554 = vadd.f32 0.0, %v553
    %555 = vdwg.mxu0
    %v556 = vadd.f32 %v502, %v548
    %v557 = vadd.f32 %v503, %v550
    %v558 = vadd.f32 %v504, %v552
    %v559 = vadd.f32 %v505, %v554
    %v560 = vxor.u32 %v556, 2147483648
    %v561 = vxor.u32 %v557, 2147483648
    %v562 = vxor.u32 %v558, 2147483648
    %v563 = vxor.u32 %v559, 2147483648
    %v564 = vmul.f32 %v560, 1.442695
    %v565 = vpow.pop %v564
    %v566 = vmul.f32 %v561, 1.442695
    %v567 = vpow.pop %v566
    %v568 = vmul.f32 %v562, 1.442695
    %v569 = vpow.pop %v568
    %v570 = vmul.f32 %v563, 1.442695
    %v571 = vpow.pop %v570
    %v572 = vadd.f32 %v565, 1.0
    %v573 = vadd.f32 %v567, 1.0
    %v574 = vadd.f32 %v569, 1.0
    %v575 = vadd.f32 %v571, 1.0
    %v576 = vrcp.pop %v572
    %v577 = vmul.f32 1.0, %v576
    %v578 = vrcp.pop %v573
    %v579 = vmul.f32 1.0, %v578
    %v580 = vrcp.pop %v574
    %v581 = vmul.f32 1.0, %v580
    %v582 = vrcp.pop %v575
    %v583 = vmul.f32 1.0, %v582
    %v584 = vmul.f32 %v579, 2.0
    %v585 = vmul.f32 %v583, 2.0
    %v586 = vsub.f32 %v584, 1.0
    %v587 = vsub.f32 %v585, 1.0
    %v588 = vmul.f32 %v577, %v493
    %v589 = vmul.f32 %v581, %v494
    %v590 = vmul.f32 %v577, %v586
    %v591 = vmul.f32 %v581, %v587
    %594 = vrot.lane.b32.xlu0 %v590, 64
    %v595 = vpop.permute.xlu0 %594
    %596 = vrot.lane.b32.xlu0 %v591, 64
    %v597 = vpop.permute.xlu0 %596
    %v600 = vadd.f32 %v588, %v595
    %v601 = vadd.f32 %v589, %v597
    %v602 = vtanh.pop %v600
    %v603 = vtanh.pop %v601
    %v604 = vmul.f32 %v579, %v602
    %v605 = vmul.f32 %v583, %v603
    %s606 = smul.u32 4, 2
    %s607 = smul.addr %s606, 8
    %s608 = scalar_lea.vmem [#allocation2], %s607
    %v609 = vld [vmem:[%s608] sm:$0xff]
    %v610 = vld [vmem:[%s608 + $0x8] sm:$0xff]
    %v611 = vld [vmem:[%s608 + $0x10] sm:$0xff]
    %v612 = vld [vmem:[%s608 + $0x18] sm:$0xff]
    %v613 = vpack.c.bf16 %v605, %v604
    %615 = vrot.lane.b32.xlu0 %v613, 64
    %v616 = vpop.permute.xlu0 %615
    %v618 = vsel %vm402, %v616, 0
    %620 = vmatprep.subr.bf16.mxu0 %v387
    %621 = vmatpush1.bf16.msra.mxu0 %v386
    %622 = vmatprep.subr.bf16.mxu0 %v389
    %623 = vmatpush1.bf16.msra.mxu0 %v388
    %624 = vmatprep.subr.bf16.mxu0 %v391
    %625 = vmatpush1.bf16.msra.mxu0 %v390
    %626 = vmatprep.subr.bf16.mxu0 %v393
    %627 = vmatpush1.bf16.msra.mxu0 %v392
    %628 = vmatprep.subr.bf16.mxu0 0
    %629 = vmatpush1.bf16.msra.mxu0 0
    %630 = vmatprep.subr.bf16.mxu0 0
    %631 = vmatpush1.bf16.msra.mxu0 0
    %632 = vmatprep.subr.bf16.mxu0 0
    %633 = vmatpush1.bf16.msra.mxu0 0
    %634 = vmatprep.subr.bf16.mxu0 0
    %635 = vmatpush1.bf16.msra.mxu0 0
    %636 = vmatprep.subr.bf16.mxu0 0
    %637 = vmatpush1.bf16.msra.mxu0 0
    %638 = vmatprep.subr.bf16.mxu0 0
    %639 = vmatpush1.bf16.msra.mxu0 0
    %640 = vmatprep.subr.bf16.mxu0 0
    %641 = vmatpush1.bf16.msra.mxu0 0
    %642 = vmatprep.subr.bf16.mxu0 0
    %643 = vmatpush1.bf16.msra.mxu0 0
    %644 = vmatprep.subr.bf16.mxu0 0
    %645 = vmatpush1.bf16.msra.mxu0 0
    %646 = vmatprep.subr.bf16.mxu0 0
    %647 = vmatpush1.bf16.msra.mxu0 0
    %648 = vmatprep.subr.bf16.mxu0 0
    %649 = vmatpush1.bf16.msra.mxu0 0
    %650 = vmatprep.subr.bf16.mxu0 0
    %651 = vmatpush1.bf16.msra.mxu0 0
    %652 = vmatprep.mubr.bf16.mxu0 0
    %653 = vmatmul.mubr.bf16.gmra.mrb[0].mxu0 %v618
    %v654 = vpop.f32.mrb[0].mxu0
    %v655 = vadd.f32 0.0, %v654
    %v656 = vpop.f32.mrb[0].mxu0
    %v657 = vadd.f32 0.0, %v656
    %v658 = vpop.f32.mrb[0].mxu0
    %v659 = vadd.f32 0.0, %v658
    %v660 = vpop.f32.mrb[0].mxu0
    %v661 = vadd.f32 0.0, %v660
    %662 = vdwg.mxu0
    %v663 = vadd.f32 %v609, %v655
    %v664 = vadd.f32 %v610, %v657
    %v665 = vadd.f32 %v611, %v659
    %v666 = vadd.f32 %v612, %v661
    %v667 = vxor.u32 %v663, 2147483648
    %v668 = vxor.u32 %v664, 2147483648
    %v669 = vxor.u32 %v665, 2147483648
    %v670 = vxor.u32 %v666, 2147483648
    %v671 = vmul.f32 %v667, 1.442695
    %v672 = vpow.pop %v671
    %v673 = vmul.f32 %v668, 1.442695
    %v674 = vpow.pop %v673
    %v675 = vmul.f32 %v669, 1.442695
    %v676 = vpow.pop %v675
    %v677 = vmul.f32 %v670, 1.442695
    %v678 = vpow.pop %v677
    %v679 = vadd.f32 %v672, 1.0
    %v680 = vadd.f32 %v674, 1.0
    %v681 = vadd.f32 %v676, 1.0
    %v682 = vadd.f32 %v678, 1.0
    %v683 = vrcp.pop %v679
    %v684 = vmul.f32 1.0, %v683
    %v685 = vrcp.pop %v680
    %v686 = vmul.f32 1.0, %v685
    %v687 = vrcp.pop %v681
    %v688 = vmul.f32 1.0, %v687
    %v689 = vrcp.pop %v682
    %v690 = vmul.f32 1.0, %v689
    %v691 = vmul.f32 %v686, 2.0
    %v692 = vmul.f32 %v690, 2.0
    %v693 = vsub.f32 %v691, 1.0
    %v694 = vsub.f32 %v692, 1.0
    %v695 = vmul.f32 %v684, %v600
    %v696 = vmul.f32 %v688, %v601
    %v697 = vmul.f32 %v684, %v693
    %v698 = vmul.f32 %v688, %v694
    %701 = vrot.lane.b32.xlu0 %v697, 64
    %v702 = vpop.permute.xlu0 %701
    %703 = vrot.lane.b32.xlu0 %v698, 64
    %v704 = vpop.permute.xlu0 %703
    %v707 = vadd.f32 %v695, %v702
    %v708 = vadd.f32 %v696, %v704
    %v709 = vtanh.pop %v707
    %v710 = vtanh.pop %v708
    %v711 = vmul.f32 %v686, %v709
    %v712 = vmul.f32 %v690, %v710
    %s713 = smul.u32 6, 2
    %s714 = smul.addr %s713, 8
    %s715 = scalar_lea.vmem [#allocation2], %s714
    %v716 = vld [vmem:[%s715] sm:$0xff]
    %v717 = vld [vmem:[%s715 + $0x8] sm:$0xff]
    %v718 = vld [vmem:[%s715 + $0x10] sm:$0xff]
    %v719 = vld [vmem:[%s715 + $0x18] sm:$0xff]
    %v720 = vpack.c.bf16 %v712, %v711
    %722 = vrot.lane.b32.xlu0 %v720, 64
    %v723 = vpop.permute.xlu0 %722
    %v725 = vsel %vm402, %v723, 0
    %727 = vmatprep.subr.bf16.mxu0 %v387
    %728 = vmatpush1.bf16.msra.mxu0 %v386
    %729 = vmatprep.subr.bf16.mxu0 %v389
    %730 = vmatpush1.bf16.msra.mxu0 %v388
    %731 = vmatprep.subr.bf16.mxu0 %v391
    %732 = vmatpush1.bf16.msra.mxu0 %v390
    %733 = vmatprep.subr.bf16.mxu0 %v393
    %734 = vmatpush1.bf16.msra.mxu0 %v392
    %735 = vmatprep.subr.bf16.mxu0 0
    %736 = vmatpush1.bf16.msra.mxu0 0
    %737 = vmatprep.subr.bf16.mxu0 0
    %738 = vmatpush1.bf16.msra.mxu0 0
    %739 = vmatprep.subr.bf16.mxu0 0
    %740 = vmatpush1.bf16.msra.mxu0 0
    %741 = vmatprep.subr.bf16.mxu0 0
    %742 = vmatpush1.bf16.msra.mxu0 0
    %743 = vmatprep.subr.bf16.mxu0 0
    %744 = vmatpush1.bf16.msra.mxu0 0
    %745 = vmatprep.subr.bf16.mxu0 0
    %746 = vmatpush1.bf16.msra.mxu0 0
    %747 = vmatprep.subr.bf16.mxu0 0
    %748 = vmatpush1.bf16.msra.mxu0 0
    %749 = vmatprep.subr.bf16.mxu0 0
    %750 = vmatpush1.bf16.msra.mxu0 0
    %751 = vmatprep.subr.bf16.mxu0 0
    %752 = vmatpush1.bf16.msra.mxu0 0
    %753 = vmatprep.subr.bf16.mxu0 0
    %754 = vmatpush1.bf16.msra.mxu0 0
    %755 = vmatprep.subr.bf16.mxu0 0
    %756 = vmatpush1.bf16.msra.mxu0 0
    %757 = vmatprep.subr.bf16.mxu0 0
    %758 = vmatpush1.bf16.msra.mxu0 0
    %759 = vmatprep.mubr.bf16.mxu0 0
    %760 = vmatmul.mubr.bf16.gmra.mrb[0].mxu0 %v725
    %v761 = vpop.f32.mrb[0].mxu0
    %v762 = vadd.f32 0.0, %v761
    %v763 = vpop.f32.mrb[0].mxu0
    %v764 = vadd.f32 0.0, %v763
    %v765 = vpop.f32.mrb[0].mxu0
    %v766 = vadd.f32 0.0, %v765
    %v767 = vpop.f32.mrb[0].mxu0
    %v768 = vadd.f32 0.0, %v767
    %769 = vdwg.mxu0
    %v770 = vadd.f32 %v716, %v762
    %v771 = vadd.f32 %v717, %v764
    %v772 = vadd.f32 %v718, %v766
    %v773 = vadd.f32 %v719, %v768
    %v774 = vxor.u32 %v770, 2147483648
    %v775 = vxor.u32 %v771, 2147483648
    %v776 = vxor.u32 %v772, 2147483648
    %v777 = vxor.u32 %v773, 2147483648
    %v778 = vmul.f32 %v774, 1.442695
    %v779 = vpow.pop %v778
    %v780 = vmul.f32 %v775, 1.442695
    %v781 = vpow.pop %v780
    %v782 = vmul.f32 %v776, 1.442695
    %v783 = vpow.pop %v782
    %v784 = vmul.f32 %v777, 1.442695
    %v785 = vpow.pop %v784
    %v786 = vadd.f32 %v779, 1.0
    %v787 = vadd.f32 %v781, 1.0
    %v788 = vadd.f32 %v783, 1.0
    %v789 = vadd.f32 %v785, 1.0
    %v790 = vrcp.pop %v786
    %v791 = vmul.f32 1.0, %v790
    %v792 = vrcp.pop %v787
    %v793 = vmul.f32 1.0, %v792
    %v794 = vrcp.pop %v788
    %v795 = vmul.f32 1.0, %v794
    %v796 = vrcp.pop %v789
    %v797 = vmul.f32 1.0, %v796
    %v798 = vmul.f32 %v793, 2.0
    %v799 = vmul.f32 %v797, 2.0
    %v800 = vsub.f32 %v798, 1.0
    %v801 = vsub.f32 %v799, 1.0
    %v802 = vmul.f32 %v791, %v707
    %v803 = vmul.f32 %v795, %v708
    %v804 = vmul.f32 %v791, %v800
    %v805 = vmul.f32 %v795, %v801
    %808 = vrot.lane.b32.xlu0 %v804, 64
    %v809 = vpop.permute.xlu0 %808
    %810 = vrot.lane.b32.xlu0 %v805, 64
    %v811 = vpop.permute.xlu0 %810
    %v814 = vadd.f32 %v802, %v809
    %v815 = vadd.f32 %v803, %v811
    %v816 = vtanh.pop %v814
    %v817 = vtanh.pop %v815
    %v818 = vmul.f32 %v793, %v816
    %v819 = vmul.f32 %v797, %v817
    %s820 = smul.u32 8, 2
    %s821 = smul.addr %s820, 8
    %s822 = scalar_lea.vmem [#allocation2], %s821
    %v823 = vld [vmem:[%s822] sm:$0xff]
    %v824 = vld [vmem:[%s822 + $0x8] sm:$0xff]
    %v825 = vld [vmem:[%s822 + $0x10] sm:$0xff]
    %v826 = vld [vmem:[%s822 + $0x18] sm:$0xff]
    %v827 = vpack.c.bf16 %v819, %v818
    %829 = vrot.lane.b32.xlu0 %v827, 64
    %v830 = vpop.permute.xlu0 %829
    %v832 = vsel %vm402, %v830, 0
    %834 = vmatprep.subr.bf16.mxu0 %v387
    %835 = vmatpush1.bf16.msra.mxu0 %v386
    %836 = vmatprep.subr.bf16.mxu0 %v389
    %837 = vmatpush1.bf16.msra.mxu0 %v388
    %838 = vmatprep.subr.bf16.mxu0 %v391
    %839 = vmatpush1.bf16.msra.mxu0 %v390
    %840 = vmatprep.subr.bf16.mxu0 %v393
    %841 = vmatpush1.bf16.msra.mxu0 %v392
    %842 = vmatprep.subr.bf16.mxu0 0
    %843 = vmatpush1.bf16.msra.mxu0 0
    %844 = vmatprep.subr.bf16.mxu0 0
    %845 = vmatpush1.bf16.msra.mxu0 0
    %846 = vmatprep.subr.bf16.mxu0 0
    %847 = vmatpush1.bf16.msra.mxu0 0
    %848 = vmatprep.subr.bf16.mxu0 0
    %849 = vmatpush1.bf16.msra.mxu0 0
    %850 = vmatprep.subr.bf16.mxu0 0
    %851 = vmatpush1.bf16.msra.mxu0 0
    %852 = vmatprep.subr.bf16.mxu0 0
    %853 = vmatpush1.bf16.msra.mxu0 0
    %854 = vmatprep.subr.bf16.mxu0 0
    %855 = vmatpush1.bf16.msra.mxu0 0
    %856 = vmatprep.subr.bf16.mxu0 0
    %857 = vmatpush1.bf16.msra.mxu0 0
    %858 = vmatprep.subr.bf16.mxu0 0
    %859 = vmatpush1.bf16.msra.mxu0 0
    %860 = vmatprep.subr.bf16.mxu0 0
    %861 = vmatpush1.bf16.msra.mxu0 0
    %862 = vmatprep.subr.bf16.mxu0 0
    %863 = vmatpush1.bf16.msra.mxu0 0
    %864 = vmatprep.subr.bf16.mxu0 0
    %865 = vmatpush1.bf16.msra.mxu0 0
    %866 = vmatprep.mubr.bf16.mxu0 0
    %867 = vmatmul.mubr.bf16.gmra.mrb[0].mxu0 %v832
    %v868 = vpop.f32.mrb[0].mxu0
    %v869 = vadd.f32 0.0, %v868
    %v870 = vpop.f32.mrb[0].mxu0
    %v871 = vadd.f32 0.0, %v870
    %v872 = vpop.f32.mrb[0].mxu0
    %v873 = vadd.f32 0.0, %v872
    %v874 = vpop.f32.mrb[0].mxu0
    %v875 = vadd.f32 0.0, %v874
    %876 = vdwg.mxu0
    %v877 = vadd.f32 %v823, %v869
    %v878 = vadd.f32 %v824, %v871
    %v879 = vadd.f32 %v825, %v873
    %v880 = vadd.f32 %v826, %v875
    %v881 = vxor.u32 %v877, 2147483648
    %v882 = vxor.u32 %v878, 2147483648
    %v883 = vxor.u32 %v879, 2147483648
    %v884 = vxor.u32 %v880, 2147483648
    %v885 = vmul.f32 %v881, 1.442695
    %v886 = vpow.pop %v885
    %v887 = vmul.f32 %v882, 1.442695
    %v888 = vpow.pop %v887
    %v889 = vmul.f32 %v883, 1.442695
    %v890 = vpow.pop %v889
    %v891 = vmul.f32 %v884, 1.442695
    %v892 = vpow.pop %v891
    %v893 = vadd.f32 %v886, 1.0
    %v894 = vadd.f32 %v888, 1.0
    %v895 = vadd.f32 %v890, 1.0
    %v896 = vadd.f32 %v892, 1.0
    %v897 = vrcp.pop %v893
    %v898 = vmul.f32 1.0, %v897
    %v899 = vrcp.pop %v894
    %v900 = vmul.f32 1.0, %v899
    %v901 = vrcp.pop %v895
    %v902 = vmul.f32 1.0, %v901
    %v903 = vrcp.pop %v896
    %v904 = vmul.f32 1.0, %v903
    %v905 = vmul.f32 %v900, 2.0
    %v906 = vmul.f32 %v904, 2.0
    %v907 = vsub.f32 %v905, 1.0
    %v908 = vsub.f32 %v906, 1.0
    %v909 = vmul.f32 %v898, %v814
    %v910 = vmul.f32 %v902, %v815
    %v911 = vmul.f32 %v898, %v907
    %v912 = vmul.f32 %v902, %v908
    %915 = vrot.lane.b32.xlu0 %v911, 64
    %v916 = vpop.permute.xlu0 %915
    %917 = vrot.lane.b32.xlu0 %v912, 64
    %v918 = vpop.permute.xlu0 %917
    %v921 = vadd.f32 %v909, %v916
    %v922 = vadd.f32 %v910, %v918
    %v923 = vtanh.pop %v921
    %v924 = vtanh.pop %v922
    %v925 = vmul.f32 %v900, %v923
    %v926 = vmul.f32 %v904, %v924
    %s927 = smul.u32 10, 2
    %s928 = smul.addr %s927, 8
    %s929 = scalar_lea.vmem [#allocation2], %s928
    %v930 = vld [vmem:[%s929] sm:$0xff]
    %v931 = vld [vmem:[%s929 + $0x8] sm:$0xff]
    %v932 = vld [vmem:[%s929 + $0x10] sm:$0xff]
    %v933 = vld [vmem:[%s929 + $0x18] sm:$0xff]
    %v934 = vpack.c.bf16 %v926, %v925
    %936 = vrot.lane.b32.xlu0 %v934, 64
    %v937 = vpop.permute.xlu0 %936
    %v939 = vsel %vm402, %v937, 0
    %941 = vmatprep.subr.bf16.mxu0 %v387
    %942 = vmatpush1.bf16.msra.mxu0 %v386
    %943 = vmatprep.subr.bf16.mxu0 %v389
    %944 = vmatpush1.bf16.msra.mxu0 %v388
    %945 = vmatprep.subr.bf16.mxu0 %v391
    %946 = vmatpush1.bf16.msra.mxu0 %v390
    %947 = vmatprep.subr.bf16.mxu0 %v393
    %948 = vmatpush1.bf16.msra.mxu0 %v392
    %949 = vmatprep.subr.bf16.mxu0 0
    %950 = vmatpush1.bf16.msra.mxu0 0
    %951 = vmatprep.subr.bf16.mxu0 0
    %952 = vmatpush1.bf16.msra.mxu0 0
    %953 = vmatprep.subr.bf16.mxu0 0
    %954 = vmatpush1.bf16.msra.mxu0 0
    %955 = vmatprep.subr.bf16.mxu0 0
    %956 = vmatpush1.bf16.msra.mxu0 0
    %957 = vmatprep.subr.bf16.mxu0 0
    %958 = vmatpush1.bf16.msra.mxu0 0
    %959 = vmatprep.subr.bf16.mxu0 0
    %960 = vmatpush1.bf16.msra.mxu0 0
    %961 = vmatprep.subr.bf16.mxu0 0
    %962 = vmatpush1.bf16.msra.mxu0 0
    %963 = vmatprep.subr.bf16.mxu0 0
    %964 = vmatpush1.bf16.msra.mxu0 0
    %965 = vmatprep.subr.bf16.mxu0 0
    %966 = vmatpush1.bf16.msra.mxu0 0
    %967 = vmatprep.subr.bf16.mxu0 0
    %968 = vmatpush1.bf16.msra.mxu0 0
    %969 = vmatprep.subr.bf16.mxu0 0
    %970 = vmatpush1.bf16.msra.mxu0 0
    %971 = vmatprep.subr.bf16.mxu0 0
    %972 = vmatpush1.bf16.msra.mxu0 0
    %973 = vmatprep.mubr.bf16.mxu0 0
    %974 = vmatmul.mubr.bf16.gmra.mrb[0].mxu0 %v939
    %v975 = vpop.f32.mrb[0].mxu0
    %v976 = vadd.f32 0.0, %v975
    %v977 = vpop.f32.mrb[0].mxu0
    %v978 = vadd.f32 0.0, %v977
    %v979 = vpop.f32.mrb[0].mxu0
    %v980 = vadd.f32 0.0, %v979
    %v981 = vpop.f32.mrb[0].mxu0
    %v982 = vadd.f32 0.0, %v981
    %983 = vdwg.mxu0
    %v984 = vadd.f32 %v930, %v976
    %v985 = vadd.f32 %v931, %v978
    %v986 = vadd.f32 %v932, %v980
    %v987 = vadd.f32 %v933, %v982
    %v988 = vxor.u32 %v984, 2147483648
    %v989 = vxor.u32 %v985, 2147483648
    %v990 = vxor.u32 %v986, 2147483648
    %v991 = vxor.u32 %v987, 2147483648
    %v992 = vmul.f32 %v988, 1.442695
    %v993 = vpow.pop %v992
    %v994 = vmul.f32 %v989, 1.442695
    %v995 = vpow.pop %v994
    %v996 = vmul.f32 %v990, 1.442695
    %v997 = vpow.pop %v996
    %v998 = vmul.f32 %v991, 1.442695
    %v999 = vpow.pop %v998
    %v1000 = vadd.f32 %v993, 1.0
    %v1001 = vadd.f32 %v995, 1.0
    %v1002 = vadd.f32 %v997, 1.0
    %v1003 = vadd.f32 %v999, 1.0
    %v1004 = vrcp.pop %v1000
    %v1005 = vmul.f32 1.0, %v1004
    %v1006 = vrcp.pop %v1001
    %v1007 = vmul.f32 1.0, %v1006
    %v1008 = vrcp.pop %v1002
    %v1009 = vmul.f32 1.0, %v1008
    %v1010 = vrcp.pop %v1003
    %v1011 = vmul.f32 1.0, %v1010
    %v1012 = vmul.f32 %v1007, 2.0
    %v1013 = vmul.f32 %v1011, 2.0
    %v1014 = vsub.f32 %v1012, 1.0
    %v1015 = vsub.f32 %v1013, 1.0
    %v1016 = vmul.f32 %v1005, %v921
    %v1017 = vmul.f32 %v1009, %v922
    %v1018 = vmul.f32 %v1005, %v1014
    %v1019 = vmul.f32 %v1009, %v1015
    %1022 = vrot.lane.b32.xlu0 %v1018, 64
    %v1023 = vpop.permute.xlu0 %1022
    %1024 = vrot.lane.b32.xlu0 %v1019, 64
    %v1025 = vpop.permute.xlu0 %1024
    %v1028 = vadd.f32 %v1016, %v1023
    %v1029 = vadd.f32 %v1017, %v1025
    %v1030 = vtanh.pop %v1028
    %v1031 = vtanh.pop %v1029
    %v1032 = vmul.f32 %v1007, %v1030
    %v1033 = vmul.f32 %v1011, %v1031
    %s1034 = smul.u32 12, 2
    %s1035 = smul.addr %s1034, 8
    %s1036 = scalar_lea.vmem [#allocation2], %s1035
    %v1037 = vld [vmem:[%s1036] sm:$0xff]
    %v1038 = vld [vmem:[%s1036 + $0x8] sm:$0xff]
    %v1039 = vld [vmem:[%s1036 + $0x10] sm:$0xff]
    %v1040 = vld [vmem:[%s1036 + $0x18] sm:$0xff]
    %v1041 = vpack.c.bf16 %v1033, %v1032
    %1043 = vrot.lane.b32.xlu0 %v1041, 64
    %v1044 = vpop.permute.xlu0 %1043
    %v1046 = vsel %vm402, %v1044, 0
    %1048 = vmatprep.subr.bf16.mxu0 %v387
    %1049 = vmatpush1.bf16.msra.mxu0 %v386
    %1050 = vmatprep.subr.bf16.mxu0 %v389
    %1051 = vmatpush1.bf16.msra.mxu0 %v388
    %1052 = vmatprep.subr.bf16.mxu0 %v391
    %1053 = vmatpush1.bf16.msra.mxu0 %v390
    %1054 = vmatprep.subr.bf16.mxu0 %v393
    %1055 = vmatpush1.bf16.msra.mxu0 %v392
    %1056 = vmatprep.subr.bf16.mxu0 0
    %1057 = vmatpush1.bf16.msra.mxu0 0
    %1058 = vmatprep.subr.bf16.mxu0 0
    %1059 = vmatpush1.bf16.msra.mxu0 0
    %1060 = vmatprep.subr.bf16.mxu0 0
    %1061 = vmatpush1.bf16.msra.mxu0 0
    %1062 = vmatprep.subr.bf16.mxu0 0
    %1063 = vmatpush1.bf16.msra.mxu0 0
    %1064 = vmatprep.subr.bf16.mxu0 0
    %1065 = vmatpush1.bf16.msra.mxu0 0
    %1066 = vmatprep.subr.bf16.mxu0 0
    %1067 = vmatpush1.bf16.msra.mxu0 0
    %1068 = vmatprep.subr.bf16.mxu0 0
    %1069 = vmatpush1.bf16.msra.mxu0 0
    %1070 = vmatprep.subr.bf16.mxu0 0
    %1071 = vmatpush1.bf16.msra.mxu0 0
    %1072 = vmatprep.subr.bf16.mxu0 0
    %1073 = vmatpush1.bf16.msra.mxu0 0
    %1074 = vmatprep.subr.bf16.mxu0 0
    %1075 = vmatpush1.bf16.msra.mxu0 0
    %1076 = vmatprep.subr.bf16.mxu0 0
    %1077 = vmatpush1.bf16.msra.mxu0 0
    %1078 = vmatprep.subr.bf16.mxu0 0
    %1079 = vmatpush1.bf16.msra.mxu0 0
    %1080 = vmatprep.mubr.bf16.mxu0 0
    %1081 = vmatmul.mubr.bf16.gmra.mrb[0].mxu0 %v1046
    %v1082 = vpop.f32.mrb[0].mxu0
    %v1083 = vadd.f32 0.0, %v1082
    %v1084 = vpop.f32.mrb[0].mxu0
    %v1085 = vadd.f32 0.0, %v1084
    %v1086 = vpop.f32.mrb[0].mxu0
    %v1087 = vadd.f32 0.0, %v1086
    %v1088 = vpop.f32.mrb[0].mxu0
    %v1089 = vadd.f32 0.0, %v1088
    %1090 = vdwg.mxu0
    %v1091 = vadd.f32 %v1037, %v1083
    %v1092 = vadd.f32 %v1038, %v1085
    %v1093 = vadd.f32 %v1039, %v1087
    %v1094 = vadd.f32 %v1040, %v1089
    %v1095 = vxor.u32 %v1091, 2147483648
    %v1096 = vxor.u32 %v1092, 2147483648
    %v1097 = vxor.u32 %v1093, 2147483648
    %v1098 = vxor.u32 %v1094, 2147483648
    %v1099 = vmul.f32 %v1095, 1.442695
    %v1100 = vpow.pop %v1099
    %v1101 = vmul.f32 %v1096, 1.442695
    %v1102 = vpow.pop %v1101
    %v1103 = vmul.f32 %v1097, 1.442695
    %v1104 = vpow.pop %v1103
    %v1105 = vmul.f32 %v1098, 1.442695
    %v1106 = vpow.pop %v1105
    %v1107 = vadd.f32 %v1100, 1.0
    %v1108 = vadd.f32 %v1102, 1.0
    %v1109 = vadd.f32 %v1104, 1.0
    %v1110 = vadd.f32 %v1106, 1.0
    %v1111 = vrcp.pop %v1107
    %v1112 = vmul.f32 1.0, %v1111
    %v1113 = vrcp.pop %v1108
    %v1114 = vmul.f32 1.0, %v1113
    %v1115 = vrcp.pop %v1109
    %v1116 = vmul.f32 1.0, %v1115
    %v1117 = vrcp.pop %v1110
    %v1118 = vmul.f32 1.0, %v1117
    %v1119 = vmul.f32 %v1114, 2.0
    %v1120 = vmul.f32 %v1118, 2.0
    %v1121 = vsub.f32 %v1119, 1.0
    %v1122 = vsub.f32 %v1120, 1.0
    %v1123 = vmul.f32 %v1112, %v1028
    %v1124 = vmul.f32 %v1116, %v1029
    %v1125 = vmul.f32 %v1112, %v1121
    %v1126 = vmul.f32 %v1116, %v1122
    %1129 = vrot.lane.b32.xlu0 %v1125, 64
    %v1130 = vpop.permute.xlu0 %1129
    %1131 = vrot.lane.b32.xlu0 %v1126, 64
    %v1132 = vpop.permute.xlu0 %1131
    %v1135 = vadd.f32 %v1123, %v1130
    %v1136 = vadd.f32 %v1124, %v1132
    %v1137 = vtanh.pop %v1135
    %v1138 = vtanh.pop %v1136
    %v1139 = vmul.f32 %v1114, %v1137
    %v1140 = vmul.f32 %v1118, %v1138
    %s1141 = smul.u32 14, 2
    %s1142 = smul.addr %s1141, 8
    %s1143 = scalar_lea.vmem [#allocation2], %s1142
    %v1144 = vld [vmem:[%s1143] sm:$0xff]
    %v1145 = vld [vmem:[%s1143 + $0x8] sm:$0xff]
    %v1146 = vld [vmem:[%s1143 + $0x10] sm:$0xff]
    %v1147 = vld [vmem:[%s1143 + $0x18] sm:$0xff]
    %v1148 = vpack.c.bf16 %v1140, %v1139
    %1150 = vrot.lane.b32.xlu0 %v1148, 64
    %v1151 = vpop.permute.xlu0 %1150
    %v1153 = vsel %vm402, %v1151, 0
    %1155 = vmatprep.subr.bf16.mxu0 %v387
    %1156 = vmatpush1.bf16.msra.mxu0 %v386
    %1157 = vmatprep.subr.bf16.mxu0 %v389
    %1158 = vmatpush1.bf16.msra.mxu0 %v388
    %1159 = vmatprep.subr.bf16.mxu0 %v391
    %1160 = vmatpush1.bf16.msra.mxu0 %v390
    %1161 = vmatprep.subr.bf16.mxu0 %v393
    %1162 = vmatpush1.bf16.msra.mxu0 %v392
    %1163 = vmatprep.subr.bf16.mxu0 0
    %1164 = vmatpush1.bf16.msra.mxu0 0
    %1165 = vmatprep.subr.bf16.mxu0 0
    %1166 = vmatpush1.bf16.msra.mxu0 0
    %1167 = vmatprep.subr.bf16.mxu0 0
    %1168 = vmatpush1.bf16.msra.mxu0 0
    %1169 = vmatprep.subr.bf16.mxu0 0
    %1170 = vmatpush1.bf16.msra.mxu0 0
    %1171 = vmatprep.subr.bf16.mxu0 0
    %1172 = vmatpush1.bf16.msra.mxu0 0
    %1173 = vmatprep.subr.bf16.mxu0 0
    %1174 = vmatpush1.bf16.msra.mxu0 0
    %1175 = vmatprep.subr.bf16.mxu0 0
    %1176 = vmatpush1.bf16.msra.mxu0 0
    %1177 = vmatprep.subr.bf16.mxu0 0
    %1178 = vmatpush1.bf16.msra.mxu0 0
    %1179 = vmatprep.subr.bf16.mxu0 0
    %1180 = vmatpush1.bf16.msra.mxu0 0
    %1181 = vmatprep.subr.bf16.mxu0 0
    %1182 = vmatpush1.bf16.msra.mxu0 0
    %1183 = vmatprep.subr.bf16.mxu0 0
    %1184 = vmatpush1.bf16.msra.mxu0 0
    %1185 = vmatprep.subr.bf16.mxu0 0
    %1186 = vmatpush1.bf16.msra.mxu0 0
    %1187 = vmatprep.mubr.bf16.mxu0 0
    %1188 = vmatmul.mubr.bf16.gmra.mrb[0].mxu0 %v1153
    %v1189 = vpop.f32.mrb[0].mxu0
    %v1190 = vadd.f32 0.0, %v1189
    %v1191 = vpop.f32.mrb[0].mxu0
    %v1192 = vadd.f32 0.0, %v1191
    %v1193 = vpop.f32.mrb[0].mxu0
    %v1194 = vadd.f32 0.0, %v1193
    %v1195 = vpop.f32.mrb[0].mxu0
    %v1196 = vadd.f32 0.0, %v1195
    %1197 = vdwg.mxu0
    %v1198 = vadd.f32 %v1144, %v1190
    %v1199 = vadd.f32 %v1145, %v1192
    %v1200 = vadd.f32 %v1146, %v1194
    %v1201 = vadd.f32 %v1147, %v1196
    %v1202 = vxor.u32 %v1198, 2147483648
    %v1203 = vxor.u32 %v1199, 2147483648
    %v1204 = vxor.u32 %v1200, 2147483648
    %v1205 = vxor.u32 %v1201, 2147483648
    %v1206 = vmul.f32 %v1202, 1.442695
    %v1207 = vpow.pop %v1206
    %v1208 = vmul.f32 %v1203, 1.442695
    %v1209 = vpow.pop %v1208
    %v1210 = vmul.f32 %v1204, 1.442695
    %v1211 = vpow.pop %v1210
    %v1212 = vmul.f32 %v1205, 1.442695
    %v1213 = vpow.pop %v1212
    %v1214 = vadd.f32 %v1207, 1.0
    %v1215 = vadd.f32 %v1209, 1.0
    %v1216 = vadd.f32 %v1211, 1.0
    %v1217 = vadd.f32 %v1213, 1.0
    %v1218 = vrcp.pop %v1214
    %v1219 = vmul.f32 1.0, %v1218
    %v1220 = vrcp.pop %v1215
    %v1221 = vmul.f32 1.0, %v1220
    %v1222 = vrcp.pop %v1216
    %v1223 = vmul.f32 1.0, %v1222
    %v1224 = vrcp.pop %v1217
    %v1225 = vmul.f32 1.0, %v1224
    %v1226 = vmul.f32 %v1221, 2.0
    %v1227 = vmul.f32 %v1225, 2.0
    %v1228 = vsub.f32 %v1226, 1.0
    %v1229 = vsub.f32 %v1227, 1.0
    %v1230 = vmul.f32 %v1219, %v1135
    %v1231 = vmul.f32 %v1223, %v1136
    %v1232 = vmul.f32 %v1219, %v1228
    %v1233 = vmul.f32 %v1223, %v1229
    %1236 = vrot.lane.b32.xlu0 %v1232, 64
    %v1237 = vpop.permute.xlu0 %1236
    %1238 = vrot.lane.b32.xlu0 %v1233, 64
    %v1239 = vpop.permute.xlu0 %1238
    %v1242 = vadd.f32 %v1230, %v1237
    %v1243 = vadd.f32 %v1231, %v1239
    %v1244 = vtanh.pop %v1242
    %v1245 = vtanh.pop %v1243
    %v1246 = vmul.f32 %v1221, %v1244
    %v1247 = vmul.f32 %v1225, %v1245
    %v1248 = vpack.c.bf16 %v1247, %v1246
    %v1249 = vld [vmem:[#allocation9] sm:$0xf]
    %v1250 = vld [vmem:[#allocation9 + $0x4] sm:$0xf]
    %v1251 = vld [vmem:[#allocation9 + $0x8] sm:$0xf]
    %v1252 = vld [vmem:[#allocation9 + $0xc] sm:$0xf]
    %v1253 = vld [vmem:[#allocation9 + $0x10] sm:$0xf]
    %v1254 = vld [vmem:[#allocation9 + $0x14] sm:$0xf]
    %v1255 = vld [vmem:[#allocation9 + $0x18] sm:$0xf]
    %v1256 = vld [vmem:[#allocation9 + $0x1c] sm:$0xf]
    %v1257 = vld [vmem:[%s5] sm:$0x1]
    %v1259 = vlaneseq
    %v1260 = vshrl.u32 %v1259, 7
    %v1261 = vsub.s32 0, %v1260
    %v1262 = vrot.slane %v1257, %v1261
    %1265 = vrot.lane.b32.xlu0 %v1248, 64
    %v1266 = vpop.permute.xlu0 %1265
    %v1275 = vunpack.c.l.b16 %v1249
    %v1276 = vunpack.c.l.b16 %v1250
    %v1277 = vunpack.c.l.b16 %v1251
    %v1278 = vunpack.c.l.b16 %v1252
    %v1279 = vunpack.c.l.b16 %v1253
    %v1280 = vunpack.c.l.b16 %v1254
    %v1281 = vunpack.c.l.b16 %v1255
    %v1282 = vunpack.c.l.b16 %v1256
    %v1283 = vpack.c.b16 %v1276, %v1275
    %v1284 = vpack.c.b16 %v1278, %v1277
    %v1285 = vpack.c.b16 %v1280, %v1279
    %v1286 = vpack.c.b16 %v1282, %v1281
    %v1292 = vsel %vm402, %v1266, 0
    %1294 = vmatprep.subr.bf16.mxu0 0
    %1295 = vmatpush1.bf16.msra.mxu0 %v1283
    %1296 = vmatprep.subr.bf16.mxu0 0
    %1297 = vmatpush1.bf16.msra.mxu0 %v1284
    %1298 = vmatprep.subr.bf16.mxu0 0
    %1299 = vmatpush1.bf16.msra.mxu0 %v1285
    %1300 = vmatprep.subr.bf16.mxu0 0
    %1301 = vmatpush1.bf16.msra.mxu0 %v1286
    %1302 = vmatprep.subr.bf16.mxu0 0
    %1303 = vmatpush1.bf16.msra.mxu0 0
    %1304 = vmatprep.subr.bf16.mxu0 0
    %1305 = vmatpush1.bf16.msra.mxu0 0
    %1306 = vmatprep.subr.bf16.mxu0 0
    %1307 = vmatpush1.bf16.msra.mxu0 0
    %1308 = vmatprep.subr.bf16.mxu0 0
    %1309 = vmatpush1.bf16.msra.mxu0 0
    %1310 = vmatprep.subr.bf16.mxu0 0
    %1311 = vmatpush1.bf16.msra.mxu0 0
    %1312 = vmatprep.subr.bf16.mxu0 0
    %1313 = vmatpush1.bf16.msra.mxu0 0
    %1314 = vmatprep.subr.bf16.mxu0 0
    %1315 = vmatpush1.bf16.msra.mxu0 0
    %1316 = vmatprep.subr.bf16.mxu0 0
    %1317 = vmatpush1.bf16.msra.mxu0 0
    %1318 = vmatprep.subr.bf16.mxu0 0
    %1319 = vmatpush1.bf16.msra.mxu0 0
    %1320 = vmatprep.subr.bf16.mxu0 0
    %1321 = vmatpush1.bf16.msra.mxu0 0
    %1322 = vmatprep.subr.bf16.mxu0 0
    %1323 = vmatpush1.bf16.msra.mxu0 0
    %1324 = vmatprep.subr.bf16.mxu0 0
    %1325 = vmatpush1.bf16.msra.mxu0 0
    %1326 = vmatprep.mubr.bf16.mxu0 0
    %1327 = vmatmul.mubr.bf16.gmra.mrb[0].mxu0 %v1292
    %v1328 = vpop.f32.mrb[0].mxu0
    %v1329 = vadd.f32 %v1262, %v1328
    %v1330 = vpop.f32.mrb[0].mxu0
    %v1331 = vpop.f32.mrb[0].mxu0
    %v1332 = vadd.f32 %v1262, %v1331
    %v1333 = vpop.f32.mrb[0].mxu0
    %1334 = vdwg.mxu0
    %1335 = vst [vmem:[#allocation11] sm:$0xff] %v1329
    %1336 = vst [vmem:[#allocation11 + $0x8] sm:$0xff] %v1332
    // Predicated region
    $region42: #{tpu_custom_call.1} parent=1 // pred_check
      _
    $region43: #{tpu_custom_call.1} parent=1 // pred_check_branch
      %1338 = sbr.rel (0) target = $region45
    $region44: #{tpu_custom_call.1} parent=1 // pred_region
      %s1340 = ssub.s32 256, 256
      %1341 = vsyncadd [#allocation5], %s1340
      %s1342 = sshll.u32 [#allocation11], 4
      %s1343 = int_to_ptr.vmem [resolvable:$true] %s1342
      %1348 = dma.vmem_to_hbm [thread:$0]  %s1343, 256, %s6, [#allocation5], 128, 128, 8
    $region45: #{tpu_custom_call.1} parent=1 // pred_fallthru
      _
    // Predicated region
    $region46: #{tpu_custom_call.1} parent=1 // pred_check
      _
    $region47: #{tpu_custom_call.1} parent=1 // pred_check_branch
      %1350 = sbr.rel (0) target = $region49
    $region48: #{tpu_custom_call.1} parent=1 // pred_region
      %1351 = dma.done [#allocation5], 256
    $region49: #{tpu_custom_call.1} parent=1 // pred_fallthru
      _
    %1352 = vsyncpa [#allocation4], 1
    %1353 = vsyncpa [#allocation7], 1
    %1354 = vsyncpa [#allocation10], 1
    %1355 = vsyncpa [#allocation5], 1

</llo_original>
